<compile_context>
chip_gen: v6e
topology: v6e:2x2x1
jax: 0.10.0
libtpu: 0.0.40
codegen_flags: <defaults>
</compile_context>

<pallas_src>
import jax
import jax.numpy as jnp
from jax.experimental import pallas as pl
from jax.experimental.pallas import tpu as pltpu

# Small, TPU-friendly config (hidden & vocab multiples of 128, tokens multiple of 8).
HIDDEN = 128
FFN = 4 * HIDDEN
NUM_LAYERS = 2
VOCAB = 256
LN_EPS = 1e-5  # PyTorch nn.LayerNorm default


def _round_up(x, m):
    return ((x + m - 1) // m) * m


def _cdiv(a, b):
    return (a + b - 1) // b


def _device_tuning():
    """Generation-specific token-tile cap and scoped-VMEM limit."""
    try:
        kind = jax.devices()[0].device_kind.lower()
    except Exception:
        kind = ""
    if "v7" in kind or kind == "":
        # v7x: 64 MiB physical VMEM per TC -> conservative tile + limit.
        return 2048, 48 * 1024 * 1024
    # v5e / v6e: 128 MiB physical VMEM.
    return 4096, 64 * 1024 * 1024


TM_MAX, VMEM_LIMIT = _device_tuning()


def _choose_tiling(n_tokens, tm_max):
    """Pick (tile, padded_total, num_tiles): even #tiles >= 2, minimal padding."""
    n8 = _round_up(max(n_tokens, 8), 8)
    num_tiles = _round_up(_cdiv(n8, tm_max), 2)   # even and >= 2 (v7x megacore balance)
    tm = _round_up(_cdiv(n8, num_tiles), 8)
    return tm, tm * num_tiles, num_tiles


def _layernorm(x, g, b):
    # One-pass LN: E[x] and E[x^2] together, var = E[x^2] - mu^2.
    mu = jnp.mean(x, axis=-1, keepdims=True)
    ms = jnp.mean(x * x, axis=-1, keepdims=True)
    var = ms - mu * mu
    return (x - mu) * jax.lax.rsqrt(var + LN_EPS) * g + b


def _gelu_tanh(x):
    # tanh-approximate GELU: the transcendental routes to the EUP slot.
    c = 0.7978845608028654  # sqrt(2/pi)
    return 0.5 * x * (1.0 + jnp.tanh(c * (x + 0.044715 * x * x * x)))


def _gelu_exact(x):
    # Exact (erf) GELU, PyTorch nn.GELU() default — used by the f32 reference.
    return 0.5 * x * (1.0 + jax.lax.erf(x * 0.7071067811865476))


def transformer_kernel(ids_ref, emb_ref,
                       ln1g_ref, ln1b_ref, wvo_ref, bvo_ref,
                       ln2g_ref, ln2b_ref, w1_ref, b1_ref, w2_ref, b2_ref,
                       lnfg_ref, lnfb_ref, wh_ref, bh_ref,
                       out_ref):
    tm = ids_ref.shape[0]
    ids = ids_ref[...]                                           # [tm, 1] int32

    # Fused embedding lookup: one-hot selection on the MXU (exact row pick in f32).
    onehot = (jax.lax.broadcasted_iota(jnp.int32, (tm, VOCAB), 1) == ids)
    x = jnp.dot(onehot.astype(jnp.float32), emb_ref[...],
                preferred_element_type=jnp.float32)              # [tm, H] f32

    for l in range(NUM_LAYERS):  # unrolled: NUM_LAYERS is tiny & static
        # Hoist per-layer params into locals (each slice read exactly once).
        ln1g = ln1g_ref[pl.ds(l, 1), :]
        ln1b = ln1b_ref[pl.ds(l, 1), :]
        wvo = wvo_ref[l]                       # [H, H]  bf16 (fused v->o weight)
        bvo = bvo_ref[pl.ds(l, 1), :]          # [1, H]  f32  (fused v->o bias)
        ln2g = ln2g_ref[pl.ds(l, 1), :]
        ln2b = ln2b_ref[pl.ds(l, 1), :]
        w1 = w1_ref[l]                         # [H, F]  bf16
        b1 = b1_ref[pl.ds(l, 1), :]            # [1, F]  f32
        w2 = w2_ref[l]                         # [F, H]  bf16
        b2 = b2_ref[pl.ds(l, 1), :]            # [1, H]  f32

        # --- "attention" block (q/k are dead in the reference model; v->o fused) ---
        residual = x
        h = _layernorm(x, ln1g, ln1b)
        attn_out = jnp.dot(h.astype(jnp.bfloat16), wvo,
                           preferred_element_type=jnp.float32) + bvo
        x = residual + attn_out

        # --- MLP block ---
        residual = x
        h = _layernorm(x, ln2g, ln2b)
        h = jnp.dot(h.astype(jnp.bfloat16), w1,
                    preferred_element_type=jnp.float32) + b1
        h = _gelu_tanh(h)
        h = jnp.dot(h.astype(jnp.bfloat16), w2,
                    preferred_element_type=jnp.float32) + b2
        x = residual + h

    x = _layernorm(x, lnfg_ref[...], lnfb_ref[...])
    out_ref[...] = jnp.dot(x.astype(jnp.bfloat16), wh_ref[...],
                           preferred_element_type=jnp.float32) + bh_ref[...]


def make_params(key):
    ks = jax.random.split(key, 16)
    init = lambda k, shape: (0.02 * jax.random.normal(k, shape)).astype(jnp.float32)
    L, H, F, V = NUM_LAYERS, HIDDEN, FFN, VOCAB
    return {
        "emb": init(ks[0], (V, H)),
        "ln1g": jnp.ones((L, H), jnp.float32), "ln1b": jnp.zeros((L, H), jnp.float32),
        # q/k projections exist in the PyTorch module but never influence the output;
        # kept for structural fidelity, not passed to the kernel.
        "wq": init(ks[1], (L, H, H)), "bq": init(ks[2], (L, H)),
        "wk": init(ks[3], (L, H, H)), "bk": init(ks[4], (L, H)),
        "wv": init(ks[5], (L, H, H)), "bv": init(ks[6], (L, H)),
        "wo": init(ks[7], (L, H, H)), "bo": init(ks[8], (L, H)),
        "ln2g": jnp.ones((L, H), jnp.float32), "ln2b": jnp.zeros((L, H), jnp.float32),
        "w1": init(ks[9], (L, H, F)), "b1": init(ks[10], (L, F)),
        "w2": init(ks[11], (L, F, H)), "b2": init(ks[12], (L, H)),
        "lnfg": jnp.ones((1, H), jnp.float32), "lnfb": jnp.zeros((1, H), jnp.float32),
        "wh": init(ks[13], (H, V)), "bh": init(ks[14], (1, V)),
    }


def prepare_params(params):
    """One-time parameter prep (hoisted out of forward): v->o fusion + bf16 casts.

    attn_out = (h @ Wv + bv) @ Wo + bo = h @ (Wv @ Wo) + (bv @ Wo + bo)
    """
    bf16 = jnp.bfloat16
    wvo = jnp.einsum("lij,ljk->lik", params["wv"], params["wo"])                  # [L,H,H]
    bvo = jnp.einsum("li,lij->lj", params["bv"], params["wo"]) + params["bo"]     # [L,H]
    return {
        "emb": params["emb"],
        "ln1g": params["ln1g"], "ln1b": params["ln1b"],
        "wvo": wvo.astype(bf16), "bvo": bvo,
        "ln2g": params["ln2g"], "ln2b": params["ln2b"],
        "w1": params["w1"].astype(bf16), "b1": params["b1"],
        "w2": params["w2"].astype(bf16), "b2": params["b2"],
        "lnfg": params["lnfg"], "lnfb": params["lnfb"],
        "wh": params["wh"].astype(bf16), "bh": params["bh"],
    }


@jax.jit
def forward(input_ids, kp):
    B, S = input_ids.shape
    N = B * S
    L, H, F, V = NUM_LAYERS, HIDDEN, FFN, VOCAB

    tm, Np, num_tiles = _choose_tiling(N, TM_MAX)

    # Stream int32 token ids (4 B/token); padded rows (id 0) are row-local only
    # and sliced off at the end.
    ids = input_ids.reshape(-1).astype(jnp.int32)
    if Np != N:
        ids = jnp.pad(ids, (0, Np - N))
    ids = ids.reshape(Np, 1)

    args = (ids,
            kp["emb"],
            kp["ln1g"], kp["ln1b"],
            kp["wvo"], kp["bvo"],
            kp["ln2g"], kp["ln2b"],
            kp["w1"], kp["b1"], kp["w2"], kp["b2"],
            kp["lnfg"], kp["lnfb"], kp["wh"], kp["bh"])

    # Weights / embedding table: full-array blocks with constant index maps ->
    # resident in VMEM across the token grid.
    def wspec(shape):
        return pl.BlockSpec(shape, lambda *_, _n=len(shape): (0,) * _n)

    in_specs = [
        pl.BlockSpec((tm, 1), lambda i: (i, 0)),   # ids: streamed per token tile
        wspec((V, H)),                             # embedding table (resident)
        wspec((L, H)), wspec((L, H)),              # ln1 gamma/beta
        wspec((L, H, H)), wspec((L, H)),           # fused Wvo, bvo
        wspec((L, H)), wspec((L, H)),              # ln2 gamma/beta
        wspec((L, H, F)), wspec((L, F)),           # w1, b1
        wspec((L, F, H)), wspec((L, H)),           # w2, b2
        wspec((1, H)), wspec((1, H)),              # final LN gamma/beta
        wspec((H, V)), wspec((1, V)),              # lm_head
    ]
    out_specs = pl.BlockSpec((tm, V), lambda i: (i, 0))

    # Advisory cost estimate for XLA's scheduler.
    flops = (2 * Np * V * H                                   # one-hot embedding matmul
             + NUM_LAYERS * (2 * Np * H * H + 4 * Np * H * F)  # layers
             + 2 * Np * H * V)                                 # lm_head
    transcendentals = NUM_LAYERS * Np * F                      # tanh in GELU
    bytes_accessed = (sum(int(a.size) * a.dtype.itemsize for a in args)
                      + Np * V * 4)

    logits = pl.pallas_call(
        transformer_kernel,
        out_shape=jax.ShapeDtypeStruct((Np, V), jnp.float32),
        grid_spec=pltpu.PrefetchScalarGridSpec(
            num_scalar_prefetch=0,
            grid=(num_tiles,),
            in_specs=in_specs,
            out_specs=out_specs),
        compiler_params=pltpu.CompilerParams(
            dimension_semantics=("parallel",),   # >=2 token tiles -> shards on v7x
            vmem_limit_bytes=VMEM_LIMIT),
        cost_estimate=pl.CostEstimate(
            flops=flops,
            transcendentals=transcendentals,
            bytes_accessed=bytes_accessed),
    )(*args)

    return logits[:N].reshape(B, S, V)


def forward_ref(input_ids, params):
    """Pure-JAX f32 reference mirroring the PyTorch module (unfused v->o, exact GELU)."""
    def ln(x, g, b):
        mu = x.mean(-1, keepdims=True)
        var = ((x - mu) ** 2).mean(-1, keepdims=True)
        return (x - mu) / jnp.sqrt(var + LN_EPS) * g + b

    x = params["emb"][input_ids]  # [B, S, H]
    for l in range(NUM_LAYERS):
        res = x
        h = ln(x, params["ln1g"][l], params["ln1b"][l])
        v = h @ params["wv"][l] + params["bv"][l]
        attn = v @ params["wo"][l] + params["bo"][l]
        x = res + attn
        res = x
        h = ln(x, params["ln2g"][l], params["ln2b"][l])
        h = h @ params["w1"][l] + params["b1"][l]
        h = _gelu_exact(h)
        h = h @ params["w2"][l] + params["b2"][l]
        x = res + h
    x = ln(x, params["lnfg"][0], params["lnfb"][0])
    return x @ params["wh"] + params["bh"][0]


if __name__ == "__main__":
    key = jax.random.PRNGKey(0)
    pkey, ikey = jax.random.split(key)
    params = make_params(pkey)
    kernel_params = prepare_params(params)   # one-time prep (fusion + bf16 casts)

    B, S = 2, 8
    input_ids = jax.random.randint(ikey, (B, S), 0, VOCAB, dtype=jnp.int32)

    logits = forward(input_ids, kernel_params)
    logits = jax.block_until_ready(logits)

    assert logits.shape == (B, S, VOCAB), logits.shape
    assert jnp.all(jnp.isfinite(logits))

    ref = forward_ref(input_ids, params)
    # bf16 MXU matmuls (f32 accumulation) + tanh-GELU vs. exact-erf f32 reference
    # -> loose-but-meaningful tolerance.
    max_err = float(jnp.max(jnp.abs(logits - ref)))
    assert jnp.allclose(logits, ref, atol=3e-2, rtol=3e-2), max_err

    print("KERNEL_OK")
</pallas_src>

<mosaic_0001>
module attributes {stable_mosaic.version = 11 : i64} {
  func.func @transformer_kernel(%arg0: i32, %arg1: memref<8x1xi32, #tpu.memory_space<vmem>>, %arg2: memref<256x128xf32, #tpu.memory_space<vmem>>, %arg3: memref<2x128xf32, #tpu.memory_space<vmem>>, %arg4: memref<2x128xf32, #tpu.memory_space<vmem>>, %arg5: memref<2x128x128xbf16, #tpu.memory_space<vmem>>, %arg6: memref<2x128xf32, #tpu.memory_space<vmem>>, %arg7: memref<2x128xf32, #tpu.memory_space<vmem>>, %arg8: memref<2x128xf32, #tpu.memory_space<vmem>>, %arg9: memref<2x128x512xbf16, #tpu.memory_space<vmem>>, %arg10: memref<2x512xf32, #tpu.memory_space<vmem>>, %arg11: memref<2x512x128xbf16, #tpu.memory_space<vmem>>, %arg12: memref<2x128xf32, #tpu.memory_space<vmem>>, %arg13: memref<1x128xf32, #tpu.memory_space<vmem>>, %arg14: memref<1x128xf32, #tpu.memory_space<vmem>>, %arg15: memref<128x256xbf16, #tpu.memory_space<vmem>>, %arg16: memref<1x256xf32, #tpu.memory_space<vmem>>, %arg17: memref<8x256xf32, #tpu.memory_space<vmem>>) attributes {dimension_semantics = [#tpu.dimension_semantics<parallel>], iteration_bounds = array<i64: 2>, scalar_prefetch = 0 : i64, scratch_operands = 0 : i64, tpu.core_type = #tpu.core_type<tc>, window_params = [{transform_indices = @transform_0, window_bounds = array<i64: 8, 1>}, {pipeline_mode = #tpu.pipeline_mode<synchronous>, transform_indices = @transform_1, window_bounds = array<i64: 256, 128>}, {pipeline_mode = #tpu.pipeline_mode<synchronous>, transform_indices = @transform_2, window_bounds = array<i64: 2, 128>}, {pipeline_mode = #tpu.pipeline_mode<synchronous>, transform_indices = @transform_3, window_bounds = array<i64: 2, 128>}, {pipeline_mode = #tpu.pipeline_mode<synchronous>, transform_indices = @transform_4, window_bounds = array<i64: 2, 128, 128>}, {pipeline_mode = #tpu.pipeline_mode<synchronous>, transform_indices = @transform_5, window_bounds = array<i64: 2, 128>}, {pipeline_mode = #tpu.pipeline_mode<synchronous>, transform_indices = @transform_6, window_bounds = array<i64: 2, 128>}, {pipeline_mode = #tpu.pipeline_mode<synchronous>, transform_indices = @transform_7, window_bounds = array<i64: 2, 128>}, {pipeline_mode = #tpu.pipeline_mode<synchronous>, transform_indices = @transform_8, window_bounds = array<i64: 2, 128, 512>}, {pipeline_mode = #tpu.pipeline_mode<synchronous>, transform_indices = @transform_9, window_bounds = array<i64: 2, 512>}, {pipeline_mode = #tpu.pipeline_mode<synchronous>, transform_indices = @transform_10, window_bounds = array<i64: 2, 512, 128>}, {pipeline_mode = #tpu.pipeline_mode<synchronous>, transform_indices = @transform_11, window_bounds = array<i64: 2, 128>}, {pipeline_mode = #tpu.pipeline_mode<synchronous>, transform_indices = @transform_12, window_bounds = array<i64: 1, 128>}, {pipeline_mode = #tpu.pipeline_mode<synchronous>, transform_indices = @transform_13, window_bounds = array<i64: 1, 128>}, {pipeline_mode = #tpu.pipeline_mode<synchronous>, transform_indices = @transform_14, window_bounds = array<i64: 128, 256>}, {pipeline_mode = #tpu.pipeline_mode<synchronous>, transform_indices = @transform_15, window_bounds = array<i64: 1, 256>}, {transform_indices = @transform_16, window_bounds = array<i64: 8, 256>}]} {
    %c0 = arith.constant 0 : index
    %c0_0 = arith.constant 0 : index
    %0 = vector.load %arg1[%c0, %c0_0] : memref<8x1xi32, #tpu.memory_space<vmem>>, vector<8x1xi32>
    %1 = tpu.iota {dimensions = array<i32: 1>} : vector<8x256xi32>
    %2 = vector.broadcast %0 : vector<8x1xi32> to vector<8x256xi32>
    %3 = arith.cmpi eq, %1, %2 : vector<8x256xi32>
    %4 = arith.extui %3 : vector<8x256xi1> to vector<8x256xi32>
    %5 = arith.sitofp %4 : vector<8x256xi32> to vector<8x256xf32>
    %c0_1 = arith.constant 0 : index
    %c0_2 = arith.constant 0 : index
    %6 = vector.load %arg2[%c0_1, %c0_2] : memref<256x128xf32, #tpu.memory_space<vmem>>, vector<256x128xf32>
    %cst = arith.constant dense<0.000000e+00> : vector<8x128xf32>
    %7 = tpu.matmul %5, %6, %cst {dimension_numbers = #tpu.dot_dimension_numbers<[1], [0], [0], [1], [0, 0, 1, 1], [], []>} : vector<8x256xf32>, vector<256x128xf32>, vector<8x128xf32> -> vector<8x128xf32>
    %c0_3 = arith.constant 0 : index
    %c0_4 = arith.constant 0 : index
    %8 = vector.load %arg3[%c0_3, %c0_4] : memref<2x128xf32, #tpu.memory_space<vmem>>, vector<1x128xf32>
    %c0_5 = arith.constant 0 : index
    %c0_6 = arith.constant 0 : index
    %9 = vector.load %arg4[%c0_5, %c0_6] : memref<2x128xf32, #tpu.memory_space<vmem>>, vector<1x128xf32>
    %c0_7 = arith.constant 0 : index
    %c0_8 = arith.constant 0 : index
    %c0_9 = arith.constant 0 : index
    %10 = vector.load %arg5[%c0_7, %c0_8, %c0_9] : memref<2x128x128xbf16, #tpu.memory_space<vmem>>, vector<1x128x128xbf16>
    %11 = vector.shape_cast %10 : vector<1x128x128xbf16> to vector<128x128xbf16>
    %c0_10 = arith.constant 0 : index
    %c0_11 = arith.constant 0 : index
    %12 = vector.load %arg6[%c0_10, %c0_11] : memref<2x128xf32, #tpu.memory_space<vmem>>, vector<1x128xf32>
    %c0_12 = arith.constant 0 : index
    %c0_13 = arith.constant 0 : index
    %13 = vector.load %arg7[%c0_12, %c0_13] : memref<2x128xf32, #tpu.memory_space<vmem>>, vector<1x128xf32>
    %c0_14 = arith.constant 0 : index
    %c0_15 = arith.constant 0 : index
    %14 = vector.load %arg8[%c0_14, %c0_15] : memref<2x128xf32, #tpu.memory_space<vmem>>, vector<1x128xf32>
    %c0_16 = arith.constant 0 : index
    %c0_17 = arith.constant 0 : index
    %c0_18 = arith.constant 0 : index
    %15 = vector.load %arg9[%c0_16, %c0_17, %c0_18] : memref<2x128x512xbf16, #tpu.memory_space<vmem>>, vector<1x128x512xbf16>
    %16 = vector.shape_cast %15 : vector<1x128x512xbf16> to vector<128x512xbf16>
    %c0_19 = arith.constant 0 : index
    %c0_20 = arith.constant 0 : index
    %17 = vector.load %arg10[%c0_19, %c0_20] : memref<2x512xf32, #tpu.memory_space<vmem>>, vector<1x512xf32>
    %c0_21 = arith.constant 0 : index
    %c0_22 = arith.constant 0 : index
    %c0_23 = arith.constant 0 : index
    %18 = vector.load %arg11[%c0_21, %c0_22, %c0_23] : memref<2x512x128xbf16, #tpu.memory_space<vmem>>, vector<1x512x128xbf16>
    %19 = vector.shape_cast %18 : vector<1x512x128xbf16> to vector<512x128xbf16>
    %c0_24 = arith.constant 0 : index
    %c0_25 = arith.constant 0 : index
    %20 = vector.load %arg12[%c0_24, %c0_25] : memref<2x128xf32, #tpu.memory_space<vmem>>, vector<1x128xf32>
    %cst_26 = arith.constant dense<0.000000e+00> : vector<8xf32>
    %21 = vector.multi_reduction <add>, %7, %cst_26 [1] : vector<8x128xf32> to vector<8xf32>
    %22 = vector.shape_cast %21 : vector<8xf32> to vector<8x1xf32>
    %cst_27 = arith.constant 1.280000e+02 : f32
    %23 = vector.broadcast %cst_27 : f32 to vector<8x1xf32>
    %24 = arith.divf %22, %23 : vector<8x1xf32>
    %25 = arith.mulf %7, %7 : vector<8x128xf32>
    %cst_28 = arith.constant dense<0.000000e+00> : vector<8xf32>
    %26 = vector.multi_reduction <add>, %25, %cst_28 [1] : vector<8x128xf32> to vector<8xf32>
    %27 = vector.shape_cast %26 : vector<8xf32> to vector<8x1xf32>
    %cst_29 = arith.constant 1.280000e+02 : f32
    %28 = vector.broadcast %cst_29 : f32 to vector<8x1xf32>
    %29 = arith.divf %27, %28 : vector<8x1xf32>
    %30 = arith.mulf %24, %24 : vector<8x1xf32>
    %31 = arith.subf %29, %30 : vector<8x1xf32>
    %32 = vector.broadcast %24 : vector<8x1xf32> to vector<8x128xf32>
    %33 = arith.subf %7, %32 : vector<8x128xf32>
    %cst_30 = arith.constant 9.99999974E-6 : f32
    %34 = vector.broadcast %cst_30 : f32 to vector<8x1xf32>
    %35 = arith.addf %31, %34 : vector<8x1xf32>
    %36 = math.rsqrt %35 : vector<8x1xf32>
    %37 = vector.broadcast %36 : vector<8x1xf32> to vector<8x128xf32>
    %38 = arith.mulf %33, %37 : vector<8x128xf32>
    %39 = vector.broadcast %8 : vector<1x128xf32> to vector<8x128xf32>
    %40 = arith.mulf %38, %39 : vector<8x128xf32>
    %41 = vector.broadcast %9 : vector<1x128xf32> to vector<8x128xf32>
    %42 = arith.addf %40, %41 : vector<8x128xf32>
    %43 = arith.truncf %42 : vector<8x128xf32> to vector<8x128xbf16>
    %cst_31 = arith.constant dense<0.000000e+00> : vector<8x128xf32>
    %44 = tpu.matmul %43, %11, %cst_31 {dimension_numbers = #tpu.dot_dimension_numbers<[1], [0], [0], [1], [0, 0, 1, 1], [], []>} : vector<8x128xbf16>, vector<128x128xbf16>, vector<8x128xf32> -> vector<8x128xf32>
    %45 = vector.broadcast %12 : vector<1x128xf32> to vector<8x128xf32>
    %46 = arith.addf %44, %45 : vector<8x128xf32>
    %47 = arith.addf %7, %46 : vector<8x128xf32>
    %cst_32 = arith.constant dense<0.000000e+00> : vector<8xf32>
    %48 = vector.multi_reduction <add>, %47, %cst_32 [1] : vector<8x128xf32> to vector<8xf32>
    %49 = vector.shape_cast %48 : vector<8xf32> to vector<8x1xf32>
    %cst_33 = arith.constant 1.280000e+02 : f32
    %50 = vector.broadcast %cst_33 : f32 to vector<8x1xf32>
    %51 = arith.divf %49, %50 : vector<8x1xf32>
    %52 = arith.mulf %47, %47 : vector<8x128xf32>
    %cst_34 = arith.constant dense<0.000000e+00> : vector<8xf32>
    %53 = vector.multi_reduction <add>, %52, %cst_34 [1] : vector<8x128xf32> to vector<8xf32>
    %54 = vector.shape_cast %53 : vector<8xf32> to vector<8x1xf32>
    %cst_35 = arith.constant 1.280000e+02 : f32
    %55 = vector.broadcast %cst_35 : f32 to vector<8x1xf32>
    %56 = arith.divf %54, %55 : vector<8x1xf32>
    %57 = arith.mulf %51, %51 : vector<8x1xf32>
    %58 = arith.subf %56, %57 : vector<8x1xf32>
    %59 = vector.broadcast %51 : vector<8x1xf32> to vector<8x128xf32>
    %60 = arith.subf %47, %59 : vector<8x128xf32>
    %cst_36 = arith.constant 9.99999974E-6 : f32
    %61 = vector.broadcast %cst_36 : f32 to vector<8x1xf32>
    %62 = arith.addf %58, %61 : vector<8x1xf32>
    %63 = math.rsqrt %62 : vector<8x1xf32>
    %64 = vector.broadcast %63 : vector<8x1xf32> to vector<8x128xf32>
    %65 = arith.mulf %60, %64 : vector<8x128xf32>
    %66 = vector.broadcast %13 : vector<1x128xf32> to vector<8x128xf32>
    %67 = arith.mulf %65, %66 : vector<8x128xf32>
    %68 = vector.broadcast %14 : vector<1x128xf32> to vector<8x128xf32>
    %69 = arith.addf %67, %68 : vector<8x128xf32>
    %70 = arith.truncf %69 : vector<8x128xf32> to vector<8x128xbf16>
    %cst_37 = arith.constant dense<0.000000e+00> : vector<8x512xf32>
    %71 = tpu.matmul %70, %16, %cst_37 {dimension_numbers = #tpu.dot_dimension_numbers<[1], [0], [0], [1], [0, 0, 1, 1], [], []>} : vector<8x128xbf16>, vector<128x512xbf16>, vector<8x512xf32> -> vector<8x512xf32>
    %72 = vector.broadcast %17 : vector<1x512xf32> to vector<8x512xf32>
    %73 = arith.addf %71, %72 : vector<8x512xf32>
    %cst_38 = arith.constant 5.000000e-01 : f32
    %74 = vector.broadcast %cst_38 : f32 to vector<8x512xf32>
    %75 = arith.mulf %74, %73 : vector<8x512xf32>
    %cst_39 = arith.constant 4.471500e-02 : f32
    %76 = vector.broadcast %cst_39 : f32 to vector<8x512xf32>
    %77 = arith.mulf %76, %73 : vector<8x512xf32>
    %78 = arith.mulf %77, %73 : vector<8x512xf32>
    %79 = arith.mulf %78, %73 : vector<8x512xf32>
    %80 = arith.addf %73, %79 : vector<8x512xf32>
    %cst_40 = arith.constant 0.797884583 : f32
    %81 = vector.broadcast %cst_40 : f32 to vector<8x512xf32>
    %82 = arith.mulf %81, %80 : vector<8x512xf32>
    %83 = math.tanh %82 : vector<8x512xf32>
    %cst_41 = arith.constant 1.000000e+00 : f32
    %84 = vector.broadcast %cst_41 : f32 to vector<8x512xf32>
    %85 = arith.addf %84, %83 : vector<8x512xf32>
    %86 = arith.mulf %75, %85 : vector<8x512xf32>
    %87 = arith.truncf %86 : vector<8x512xf32> to vector<8x512xbf16>
    %cst_42 = arith.constant dense<0.000000e+00> : vector<8x128xf32>
    %88 = tpu.matmul %87, %19, %cst_42 {dimension_numbers = #tpu.dot_dimension_numbers<[1], [0], [0], [1], [0, 0, 1, 1], [], []>} : vector<8x512xbf16>, vector<512x128xbf16>, vector<8x128xf32> -> vector<8x128xf32>
    %89 = vector.broadcast %20 : vector<1x128xf32> to vector<8x128xf32>
    %90 = arith.addf %88, %89 : vector<8x128xf32>
    %91 = arith.addf %47, %90 : vector<8x128xf32>
    %c1 = arith.constant 1 : index
    %c0_43 = arith.constant 0 : index
    %92 = vector.load %arg3[%c1, %c0_43] : memref<2x128xf32, #tpu.memory_space<vmem>>, vector<1x128xf32>
    %c1_44 = arith.constant 1 : index
    %c0_45 = arith.constant 0 : index
    %93 = vector.load %arg4[%c1_44, %c0_45] : memref<2x128xf32, #tpu.memory_space<vmem>>, vector<1x128xf32>
    %c1_46 = arith.constant 1 : index
    %c0_47 = arith.constant 0 : index
    %c0_48 = arith.constant 0 : index
    %94 = vector.load %arg5[%c1_46, %c0_47, %c0_48] : memref<2x128x128xbf16, #tpu.memory_space<vmem>>, vector<1x128x128xbf16>
    %95 = vector.shape_cast %94 : vector<1x128x128xbf16> to vector<128x128xbf16>
    %c1_49 = arith.constant 1 : index
    %c0_50 = arith.constant 0 : index
    %96 = vector.load %arg6[%c1_49, %c0_50] : memref<2x128xf32, #tpu.memory_space<vmem>>, vector<1x128xf32>
    %c1_51 = arith.constant 1 : index
    %c0_52 = arith.constant 0 : index
    %97 = vector.load %arg7[%c1_51, %c0_52] : memref<2x128xf32, #tpu.memory_space<vmem>>, vector<1x128xf32>
    %c1_53 = arith.constant 1 : index
    %c0_54 = arith.constant 0 : index
    %98 = vector.load %arg8[%c1_53, %c0_54] : memref<2x128xf32, #tpu.memory_space<vmem>>, vector<1x128xf32>
    %c1_55 = arith.constant 1 : index
    %c0_56 = arith.constant 0 : index
    %c0_57 = arith.constant 0 : index
    %99 = vector.load %arg9[%c1_55, %c0_56, %c0_57] : memref<2x128x512xbf16, #tpu.memory_space<vmem>>, vector<1x128x512xbf16>
    %100 = vector.shape_cast %99 : vector<1x128x512xbf16> to vector<128x512xbf16>
    %c1_58 = arith.constant 1 : index
    %c0_59 = arith.constant 0 : index
    %101 = vector.load %arg10[%c1_58, %c0_59] : memref<2x512xf32, #tpu.memory_space<vmem>>, vector<1x512xf32>
    %c1_60 = arith.constant 1 : index
    %c0_61 = arith.constant 0 : index
    %c0_62 = arith.constant 0 : index
    %102 = vector.load %arg11[%c1_60, %c0_61, %c0_62] : memref<2x512x128xbf16, #tpu.memory_space<vmem>>, vector<1x512x128xbf16>
    %103 = vector.shape_cast %102 : vector<1x512x128xbf16> to vector<512x128xbf16>
    %c1_63 = arith.constant 1 : index
    %c0_64 = arith.constant 0 : index
    %104 = vector.load %arg12[%c1_63, %c0_64] : memref<2x128xf32, #tpu.memory_space<vmem>>, vector<1x128xf32>
    %cst_65 = arith.constant dense<0.000000e+00> : vector<8xf32>
    %105 = vector.multi_reduction <add>, %91, %cst_65 [1] : vector<8x128xf32> to vector<8xf32>
    %106 = vector.shape_cast %105 : vector<8xf32> to vector<8x1xf32>
    %cst_66 = arith.constant 1.280000e+02 : f32
    %107 = vector.broadcast %cst_66 : f32 to vector<8x1xf32>
    %108 = arith.divf %106, %107 : vector<8x1xf32>
    %109 = arith.mulf %91, %91 : vector<8x128xf32>
    %cst_67 = arith.constant dense<0.000000e+00> : vector<8xf32>
    %110 = vector.multi_reduction <add>, %109, %cst_67 [1] : vector<8x128xf32> to vector<8xf32>
    %111 = vector.shape_cast %110 : vector<8xf32> to vector<8x1xf32>
    %cst_68 = arith.constant 1.280000e+02 : f32
    %112 = vector.broadcast %cst_68 : f32 to vector<8x1xf32>
    %113 = arith.divf %111, %112 : vector<8x1xf32>
    %114 = arith.mulf %108, %108 : vector<8x1xf32>
    %115 = arith.subf %113, %114 : vector<8x1xf32>
    %116 = vector.broadcast %108 : vector<8x1xf32> to vector<8x128xf32>
    %117 = arith.subf %91, %116 : vector<8x128xf32>
    %cst_69 = arith.constant 9.99999974E-6 : f32
    %118 = vector.broadcast %cst_69 : f32 to vector<8x1xf32>
    %119 = arith.addf %115, %118 : vector<8x1xf32>
    %120 = math.rsqrt %119 : vector<8x1xf32>
    %121 = vector.broadcast %120 : vector<8x1xf32> to vector<8x128xf32>
    %122 = arith.mulf %117, %121 : vector<8x128xf32>
    %123 = vector.broadcast %92 : vector<1x128xf32> to vector<8x128xf32>
    %124 = arith.mulf %122, %123 : vector<8x128xf32>
    %125 = vector.broadcast %93 : vector<1x128xf32> to vector<8x128xf32>
    %126 = arith.addf %124, %125 : vector<8x128xf32>
    %127 = arith.truncf %126 : vector<8x128xf32> to vector<8x128xbf16>
    %cst_70 = arith.constant dense<0.000000e+00> : vector<8x128xf32>
    %128 = tpu.matmul %127, %95, %cst_70 {dimension_numbers = #tpu.dot_dimension_numbers<[1], [0], [0], [1], [0, 0, 1, 1], [], []>} : vector<8x128xbf16>, vector<128x128xbf16>, vector<8x128xf32> -> vector<8x128xf32>
    %129 = vector.broadcast %96 : vector<1x128xf32> to vector<8x128xf32>
    %130 = arith.addf %128, %129 : vector<8x128xf32>
    %131 = arith.addf %91, %130 : vector<8x128xf32>
    %cst_71 = arith.constant dense<0.000000e+00> : vector<8xf32>
    %132 = vector.multi_reduction <add>, %131, %cst_71 [1] : vector<8x128xf32> to vector<8xf32>
    %133 = vector.shape_cast %132 : vector<8xf32> to vector<8x1xf32>
    %cst_72 = arith.constant 1.280000e+02 : f32
    %134 = vector.broadcast %cst_72 : f32 to vector<8x1xf32>
    %135 = arith.divf %133, %134 : vector<8x1xf32>
    %136 = arith.mulf %131, %131 : vector<8x128xf32>
    %cst_73 = arith.constant dense<0.000000e+00> : vector<8xf32>
    %137 = vector.multi_reduction <add>, %136, %cst_73 [1] : vector<8x128xf32> to vector<8xf32>
    %138 = vector.shape_cast %137 : vector<8xf32> to vector<8x1xf32>
    %cst_74 = arith.constant 1.280000e+02 : f32
    %139 = vector.broadcast %cst_74 : f32 to vector<8x1xf32>
    %140 = arith.divf %138, %139 : vector<8x1xf32>
    %141 = arith.mulf %135, %135 : vector<8x1xf32>
    %142 = arith.subf %140, %141 : vector<8x1xf32>
    %143 = vector.broadcast %135 : vector<8x1xf32> to vector<8x128xf32>
    %144 = arith.subf %131, %143 : vector<8x128xf32>
    %cst_75 = arith.constant 9.99999974E-6 : f32
    %145 = vector.broadcast %cst_75 : f32 to vector<8x1xf32>
    %146 = arith.addf %142, %145 : vector<8x1xf32>
    %147 = math.rsqrt %146 : vector<8x1xf32>
    %148 = vector.broadcast %147 : vector<8x1xf32> to vector<8x128xf32>
    %149 = arith.mulf %144, %148 : vector<8x128xf32>
    %150 = vector.broadcast %97 : vector<1x128xf32> to vector<8x128xf32>
    %151 = arith.mulf %149, %150 : vector<8x128xf32>
    %152 = vector.broadcast %98 : vector<1x128xf32> to vector<8x128xf32>
    %153 = arith.addf %151, %152 : vector<8x128xf32>
    %154 = arith.truncf %153 : vector<8x128xf32> to vector<8x128xbf16>
    %cst_76 = arith.constant dense<0.000000e+00> : vector<8x512xf32>
    %155 = tpu.matmul %154, %100, %cst_76 {dimension_numbers = #tpu.dot_dimension_numbers<[1], [0], [0], [1], [0, 0, 1, 1], [], []>} : vector<8x128xbf16>, vector<128x512xbf16>, vector<8x512xf32> -> vector<8x512xf32>
    %156 = vector.broadcast %101 : vector<1x512xf32> to vector<8x512xf32>
    %157 = arith.addf %155, %156 : vector<8x512xf32>
    %cst_77 = arith.constant 5.000000e-01 : f32
    %158 = vector.broadcast %cst_77 : f32 to vector<8x512xf32>
    %159 = arith.mulf %158, %157 : vector<8x512xf32>
    %cst_78 = arith.constant 4.471500e-02 : f32
    %160 = vector.broadcast %cst_78 : f32 to vector<8x512xf32>
    %161 = arith.mulf %160, %157 : vector<8x512xf32>
    %162 = arith.mulf %161, %157 : vector<8x512xf32>
    %163 = arith.mulf %162, %157 : vector<8x512xf32>
    %164 = arith.addf %157, %163 : vector<8x512xf32>
    %cst_79 = arith.constant 0.797884583 : f32
    %165 = vector.broadcast %cst_79 : f32 to vector<8x512xf32>
    %166 = arith.mulf %165, %164 : vector<8x512xf32>
    %167 = math.tanh %166 : vector<8x512xf32>
    %cst_80 = arith.constant 1.000000e+00 : f32
    %168 = vector.broadcast %cst_80 : f32 to vector<8x512xf32>
    %169 = arith.addf %168, %167 : vector<8x512xf32>
    %170 = arith.mulf %159, %169 : vector<8x512xf32>
    %171 = arith.truncf %170 : vector<8x512xf32> to vector<8x512xbf16>
    %cst_81 = arith.constant dense<0.000000e+00> : vector<8x128xf32>
    %172 = tpu.matmul %171, %103, %cst_81 {dimension_numbers = #tpu.dot_dimension_numbers<[1], [0], [0], [1], [0, 0, 1, 1], [], []>} : vector<8x512xbf16>, vector<512x128xbf16>, vector<8x128xf32> -> vector<8x128xf32>
    %173 = vector.broadcast %104 : vector<1x128xf32> to vector<8x128xf32>
    %174 = arith.addf %172, %173 : vector<8x128xf32>
    %175 = arith.addf %131, %174 : vector<8x128xf32>
    %c0_82 = arith.constant 0 : index
    %c0_83 = arith.constant 0 : index
    %176 = vector.load %arg13[%c0_82, %c0_83] : memref<1x128xf32, #tpu.memory_space<vmem>>, vector<1x128xf32>
    %c0_84 = arith.constant 0 : index
    %c0_85 = arith.constant 0 : index
    %177 = vector.load %arg14[%c0_84, %c0_85] : memref<1x128xf32, #tpu.memory_space<vmem>>, vector<1x128xf32>
    %cst_86 = arith.constant dense<0.000000e+00> : vector<8xf32>
    %178 = vector.multi_reduction <add>, %175, %cst_86 [1] : vector<8x128xf32> to vector<8xf32>
    %179 = vector.shape_cast %178 : vector<8xf32> to vector<8x1xf32>
    %cst_87 = arith.constant 1.280000e+02 : f32
    %180 = vector.broadcast %cst_87 : f32 to vector<8x1xf32>
    %181 = arith.divf %179, %180 : vector<8x1xf32>
    %182 = arith.mulf %175, %175 : vector<8x128xf32>
    %cst_88 = arith.constant dense<0.000000e+00> : vector<8xf32>
    %183 = vector.multi_reduction <add>, %182, %cst_88 [1] : vector<8x128xf32> to vector<8xf32>
    %184 = vector.shape_cast %183 : vector<8xf32> to vector<8x1xf32>
    %cst_89 = arith.constant 1.280000e+02 : f32
    %185 = vector.broadcast %cst_89 : f32 to vector<8x1xf32>
    %186 = arith.divf %184, %185 : vector<8x1xf32>
    %187 = arith.mulf %181, %181 : vector<8x1xf32>
    %188 = arith.subf %186, %187 : vector<8x1xf32>
    %189 = vector.broadcast %181 : vector<8x1xf32> to vector<8x128xf32>
    %190 = arith.subf %175, %189 : vector<8x128xf32>
    %cst_90 = arith.constant 9.99999974E-6 : f32
    %191 = vector.broadcast %cst_90 : f32 to vector<8x1xf32>
    %192 = arith.addf %188, %191 : vector<8x1xf32>
    %193 = math.rsqrt %192 : vector<8x1xf32>
    %194 = vector.broadcast %193 : vector<8x1xf32> to vector<8x128xf32>
    %195 = arith.mulf %190, %194 : vector<8x128xf32>
    %196 = vector.broadcast %176 : vector<1x128xf32> to vector<8x128xf32>
    %197 = arith.mulf %195, %196 : vector<8x128xf32>
    %198 = vector.broadcast %177 : vector<1x128xf32> to vector<8x128xf32>
    %199 = arith.addf %197, %198 : vector<8x128xf32>
    %200 = arith.truncf %199 : vector<8x128xf32> to vector<8x128xbf16>
    %c0_91 = arith.constant 0 : index
    %c0_92 = arith.constant 0 : index
    %201 = vector.load %arg15[%c0_91, %c0_92] : memref<128x256xbf16, #tpu.memory_space<vmem>>, vector<128x256xbf16>
    %cst_93 = arith.constant dense<0.000000e+00> : vector<8x256xf32>
    %202 = tpu.matmul %200, %201, %cst_93 {dimension_numbers = #tpu.dot_dimension_numbers<[1], [0], [0], [1], [0, 0, 1, 1], [], []>} : vector<8x128xbf16>, vector<128x256xbf16>, vector<8x256xf32> -> vector<8x256xf32>
    %c0_94 = arith.constant 0 : index
    %c0_95 = arith.constant 0 : index
    %203 = vector.load %arg16[%c0_94, %c0_95] : memref<1x256xf32, #tpu.memory_space<vmem>>, vector<1x256xf32>
    %204 = vector.broadcast %203 : vector<1x256xf32> to vector<8x256xf32>
    %205 = arith.addf %202, %204 : vector<8x256xf32>
    %c0_96 = arith.constant 0 : index
    %c0_97 = arith.constant 0 : index
    %206 = vector.load %arg17[%c0_96, %c0_97] : memref<8x256xf32, #tpu.memory_space<vmem>>, vector<8x256xf32>
    tpu.vector_store %arg17[%c0_96, %c0_97], %205 {strides = array<i32>} : memref<8x256xf32, #tpu.memory_space<vmem>>, vector<8x256xf32>,
    return
  }
  func.func @transform_0(%arg0: i32) -> (i32, i32) {
    %c0_i32 = arith.constant 0 : i32
    %c0_i32_0 = arith.constant 0 : i32
    return %arg0, %c0_i32 : i32, i32
  }
  func.func @transform_1(%arg0: i32) -> (i32, i32) {
    %c0_i32 = arith.constant 0 : i32
    %c0_i32_0 = arith.constant 0 : i32
    %c0_i32_1 = arith.constant 0 : i32
    return %c0_i32, %c0_i32_0 : i32, i32
  }
  func.func @transform_2(%arg0: i32) -> (i32, i32) {
    %c0_i32 = arith.constant 0 : i32
    %c0_i32_0 = arith.constant 0 : i32
    %c0_i32_1 = arith.constant 0 : i32
    return %c0_i32, %c0_i32_0 : i32, i32
  }
  func.func @transform_3(%arg0: i32) -> (i32, i32) {
    %c0_i32 = arith.constant 0 : i32
    %c0_i32_0 = arith.constant 0 : i32
    %c0_i32_1 = arith.constant 0 : i32
    return %c0_i32, %c0_i32_0 : i32, i32
  }
  func.func @transform_4(%arg0: i32) -> (i32, i32, i32) {
    %c0_i32 = arith.constant 0 : i32
    %c0_i32_0 = arith.constant 0 : i32
    %c0_i32_1 = arith.constant 0 : i32
    %c0_i32_2 = arith.constant 0 : i32
    return %c0_i32, %c0_i32_0, %c0_i32_1 : i32, i32, i32
  }
  func.func @transform_5(%arg0: i32) -> (i32, i32) {
    %c0_i32 = arith.constant 0 : i32
    %c0_i32_0 = arith.constant 0 : i32
    %c0_i32_1 = arith.constant 0 : i32
    return %c0_i32, %c0_i32_0 : i32, i32
  }
  func.func @transform_6(%arg0: i32) -> (i32, i32) {
    %c0_i32 = arith.constant 0 : i32
    %c0_i32_0 = arith.constant 0 : i32
    %c0_i32_1 = arith.constant 0 : i32
    return %c0_i32, %c0_i32_0 : i32, i32
  }
  func.func @transform_7(%arg0: i32) -> (i32, i32) {
    %c0_i32 = arith.constant 0 : i32
    %c0_i32_0 = arith.constant 0 : i32
    %c0_i32_1 = arith.constant 0 : i32
    return %c0_i32, %c0_i32_0 : i32, i32
  }
  func.func @transform_8(%arg0: i32) -> (i32, i32, i32) {
    %c0_i32 = arith.constant 0 : i32
    %c0_i32_0 = arith.constant 0 : i32
    %c0_i32_1 = arith.constant 0 : i32
    %c0_i32_2 = arith.constant 0 : i32
    return %c0_i32, %c0_i32_0, %c0_i32_1 : i32, i32, i32
  }
  func.func @transform_9(%arg0: i32) -> (i32, i32) {
    %c0_i32 = arith.constant 0 : i32
    %c0_i32_0 = arith.constant 0 : i32
    %c0_i32_1 = arith.constant 0 : i32
    return %c0_i32, %c0_i32_0 : i32, i32
  }
  func.func @transform_10(%arg0: i32) -> (i32, i32, i32) {
    %c0_i32 = arith.constant 0 : i32
    %c0_i32_0 = arith.constant 0 : i32
    %c0_i32_1 = arith.constant 0 : i32
    %c0_i32_2 = arith.constant 0 : i32
    return %c0_i32, %c0_i32_0, %c0_i32_1 : i32, i32, i32
  }
  func.func @transform_11(%arg0: i32) -> (i32, i32) {
    %c0_i32 = arith.constant 0 : i32
    %c0_i32_0 = arith.constant 0 : i32
    %c0_i32_1 = arith.constant 0 : i32
    return %c0_i32, %c0_i32_0 : i32, i32
  }
  func.func @transform_12(%arg0: i32) -> (i32, i32) {
    %c0_i32 = arith.constant 0 : i32
    %c0_i32_0 = arith.constant 0 : i32
    %c0_i32_1 = arith.constant 0 : i32
    return %c0_i32, %c0_i32_0 : i32, i32
  }
  func.func @transform_13(%arg0: i32) -> (i32, i32) {
    %c0_i32 = arith.constant 0 : i32
    %c0_i32_0 = arith.constant 0 : i32
    %c0_i32_1 = arith.constant 0 : i32
    return %c0_i32, %c0_i32_0 : i32, i32
  }
  func.func @transform_14(%arg0: i32) -> (i32, i32) {
    %c0_i32 = arith.constant 0 : i32
    %c0_i32_0 = arith.constant 0 : i32
    %c0_i32_1 = arith.constant 0 : i32
    return %c0_i32, %c0_i32_0 : i32, i32
  }
  func.func @transform_15(%arg0: i32) -> (i32, i32) {
    %c0_i32 = arith.constant 0 : i32
    %c0_i32_0 = arith.constant 0 : i32
    %c0_i32_1 = arith.constant 0 : i32
    return %c0_i32, %c0_i32_0 : i32, i32
  }
  func.func @transform_16(%arg0: i32) -> (i32, i32) {
    %c0_i32 = arith.constant 0 : i32
    %c0_i32_0 = arith.constant 0 : i32
    return %arg0, %c0_i32 : i32, i32
  }
}

</mosaic_0001>

<llo_original>
// kernel: forward.1
$region0: #{forward.1}
  #allocation0 [shape = 'u32[]', space=smem, size = 0x4, offset = 0x4, fixed_abs, tag = 'smem constant byte address 0x4 - core index']
  #allocation1 [shape = 'u32[144,128]{1,0:T(1,128)}', space=vmem, size = 0x12000, scoped, tag = 'internal scratch']
  %s0 = inlined_call_operand.vmem [shape: s32[16,1], index: 0, kind: input, shape index: {}]
  %s1 = inlined_call_operand.hbm [shape: f32[256,128], index: 1, kind: input, shape index: {}]
  %s2 = inlined_call_operand.vmem [shape: f32[2,128], index: 2, kind: input, shape index: {}]
  %s3 = inlined_call_operand.vmem [shape: f32[2,128], index: 3, kind: input, shape index: {}]
  %s4 = inlined_call_operand.hbm [shape: bf16[2,128,128], index: 4, kind: input, shape index: {}]
  %s5 = inlined_call_operand.vmem [shape: f32[2,128], index: 5, kind: input, shape index: {}]
  %s6 = inlined_call_operand.vmem [shape: f32[2,128], index: 6, kind: input, shape index: {}]
  %s7 = inlined_call_operand.vmem [shape: f32[2,128], index: 7, kind: input, shape index: {}]
  %s8 = inlined_call_operand.hbm [shape: bf16[2,128,512], index: 8, kind: input, shape index: {}]
  %s9 = inlined_call_operand.vmem [shape: f32[2,512], index: 9, kind: input, shape index: {}]
  %s10 = inlined_call_operand.hbm [shape: bf16[2,512,128], index: 10, kind: input, shape index: {}]
  %s11 = inlined_call_operand.vmem [shape: f32[2,128], index: 11, kind: input, shape index: {}]
  %s12 = inlined_call_operand.vmem [shape: f32[1,128], index: 12, kind: input, shape index: {}]
  %s13 = inlined_call_operand.vmem [shape: f32[1,128], index: 13, kind: input, shape index: {}]
  %s14 = inlined_call_operand.hbm [shape: bf16[128,256], index: 14, kind: input, shape index: {}]
  %s15 = inlined_call_operand.vmem [shape: f32[1,256], index: 15, kind: input, shape index: {}]
  %s16 = inlined_call_operand.hbm [shape: f32[16,256], index: 16, kind: output, shape index: {}]
  %s17 = sld [smem:[#allocation0]]
  $region117: #{forward.1} parent=0
    _
  %s19 = ssub.s32 1, %s17
  %s20 = scalar_select 0, %s19, %s17
  $region1: #{forward.1} parent=0
    #allocation2 [shape = 'u8[131072]{0}', space=vmem, size = 0x20000, scoped, tag = 'input window, operand 1, single buffered']
    #allocation3 [shape = 's32[2]{0}', space=sflag, size = 0x8, scoped, tag = 'scoped memory for forward.1']
    #allocation4 [shape = 's32[2]{0}', space=sflag, size = 0x8, scoped, tag = 'scoped memory for forward.1']
    #allocation5 [shape = 'u8[65536]{0}', space=vmem, size = 0x10000, scoped, tag = 'input window, operand 4, single buffered']
    #allocation6 [shape = 's32[1]{0}', space=sflag, size = 0x4, scoped, tag = 'scoped memory for forward.1']
    #allocation7 [shape = 'u8[262144]{0}', space=vmem, size = 0x40000, scoped, tag = 'input window, operand 8, single buffered']
    #allocation8 [shape = 'u8[262144]{0}', space=vmem, size = 0x40000, scoped, tag = 'input window, operand 10, single buffered']
    #allocation9 [shape = 's32[1]{0}', space=sflag, size = 0x4, scoped, tag = 'scoped memory for forward.1']
    #allocation10 [shape = 'u8[65536]{0}', space=vmem, size = 0x10000, scoped, tag = 'input window, operand 14, single buffered']
    #allocation11 [shape = 'u8[16384]{0}', space=vmem, size = 0x4000, scoped, tag = 'output window, operand 0']
    %21 = vsyncpa [#allocation3], 0
    %22 = vsyncpa [#allocation6], 0
    %23 = vsyncpa [#allocation9], 0
    %24 = vsyncpa [#allocation4], 0
    %s25 = scalar_lea.sflag [#allocation4], 1
    %26 = vsyncpa %s25, 0
    loop: start=0, step=1, limit=4
    $region2: #{forward.1} parent=1 // loop_pre_header
      _
    $region3: #{forward.1} parent=1 // loop_header
      %s28 = sphi 0, %s32
      %p29 = scmp.ge.s32.totalorder %s28, 4
      %s38 = sphi 0, %s40
      %s41 = sphi 0, %s38
      %s42 = sphi 0, %s41
      %s58 = sphi 0, %s42
      %s62 = sphi 0, %s62
      %s64 = sphi 0, %s62
      %s65 = sphi 0, %s64
      %s79 = sphi 0, %s65
      %s83 = sphi 0, %s83
      %s85 = sphi 0, %s83
      %s86 = sphi 0, %s85
      %s100 = sphi 0, %s86
      %s104 = sphi 0, %s104
      %s106 = sphi 0, %s104
      %s107 = sphi 0, %s106
      %s121 = sphi 0, %s107
      %s125 = sphi 0, %s125
      %s127 = sphi 0, %s125
      %s128 = sphi 0, %s127
      %s142 = sphi 0, %s128
      %s146 = sphi 0, %s146
      %s148 = sphi 0, %s146
      %s149 = sphi 0, %s148
      %s163 = sphi 0, %s149
      %s167 = sphi 0, %s167
      %s169 = sphi 0, %s167
      %s170 = sphi 0, %s169
      %s184 = sphi 0, %s170
      %s188 = sphi 0, %s188
      %s190 = sphi 0, %s188
      %s191 = sphi 0, %s190
      %s205 = sphi 0, %s191
      %s209 = sphi 0, %s209
      %s211 = sphi 0, %s209
      %s212 = sphi 0, %s211
      %s226 = sphi 0, %s212
      %s230 = sphi 0, %s230
      %s232 = sphi 0, %s230
      %s233 = sphi 0, %s232
      %s247 = sphi 0, %s233
      %s251 = sphi 0, %s251
      %s253 = sphi 0, %s251
      %s254 = sphi 0, %s253
      %s268 = sphi 0, %s254
      %s272 = sphi 0, %s272
      %s274 = sphi 0, %s272
      %s275 = sphi 0, %s274
      %s289 = sphi 0, %s275
      %s293 = sphi 0, %s293
      %s295 = sphi 0, %s293
      %s296 = sphi 0, %s295
      %s310 = sphi 0, %s296
      %s314 = sphi 0, %s314
      %s316 = sphi 0, %s314
      %s317 = sphi 0, %s316
      %s331 = sphi 0, %s317
      %s335 = sphi 0, %s335
      %s337 = sphi 0, %s335
      %s338 = sphi 0, %s337
      %s352 = sphi 0, %s338
      %s356 = sphi 0, %s356
      %s358 = sphi 0, %s356
      %s359 = sphi 0, %s358
      %s373 = sphi 0, %s359
      %s379 = sphi 0, %s381
      %s382 = sphi 0, %s379
      %s383 = sphi 0, %s382
      %s399 = sphi 0, %s383
    $region4: #{forward.1} parent=1 // loop_header_branch
      %31 = sbr.rel (%p29) target = $region8
    $region5: #{forward.1} parent=1 // loop_body
      %s33 = ssub.s32 %s28, 1
      %s34 = ssub.s32 %s28, 2
      %s35 = sadd.s32 %s28, 1
      %s36 = ssub.s32 %s28, %s35
      %p37 = scmp.eq.s32.totalorder %s36, 0
      %s39 = sadd.s32 %s38, 1
      %s40 = scalar_select %p37, %s38, %s39
      %p43 = pneg %p37
      %p44 = scmp.eq.s32.totalorder %s28, 1
      %p45 = por %p43, %p44
      %p46 = scmp.ne.s32.totalorder %s38, %s41
      %p47 = scmp.eq.s32.totalorder %s28, 0
      %p48 = por %p46, %p47
      %p49 = scmp.ne.s32.totalorder %s38, %s41
      %p50 = scmp.eq.s32.totalorder %s33, 1
      %p51 = por %p49, %p50
      %p52 = scmp.ne.s32.totalorder %s41, %s42
      %p53 = scmp.eq.s32.totalorder %s33, 0
      %p54 = por %p52, %p53
      %p55 = scmp.ne.s32.totalorder %s41, %s42
      %p56 = scmp.eq.s32.totalorder %s34, 1
      %p57 = por %p55, %p56
      %p59 = scmp.ne.s32.totalorder %s42, %s58
      %p60 = scmp.eq.s32.totalorder %s34, 0
      %p61 = por %p59, %p60
      %s63 = sadd.s32 %s62, 1
      %p66 = scmp.eq.s32.totalorder %s28, 1
      %p67 = scmp.ne.s32.totalorder %s62, %s64
      %p68 = scmp.eq.s32.totalorder %s28, 0
      %p69 = por %p67, %p68
      %p70 = scmp.ne.s32.totalorder %s62, %s64
      %p71 = scmp.eq.s32.totalorder %s33, 1
      %p72 = por %p70, %p71
      %p73 = scmp.ne.s32.totalorder %s64, %s65
      %p74 = scmp.eq.s32.totalorder %s33, 0
      %p75 = por %p73, %p74
      %p76 = scmp.ne.s32.totalorder %s64, %s65
      %p77 = scmp.eq.s32.totalorder %s34, 1
      %p78 = por %p76, %p77
      %p80 = scmp.ne.s32.totalorder %s65, %s79
      %p81 = scmp.eq.s32.totalorder %s34, 0
      %p82 = por %p80, %p81
      %s84 = sadd.s32 %s83, 1
      %p87 = scmp.eq.s32.totalorder %s28, 1
      %p88 = scmp.ne.s32.totalorder %s83, %s85
      %p89 = scmp.eq.s32.totalorder %s28, 0
      %p90 = por %p88, %p89
      %p91 = scmp.ne.s32.totalorder %s83, %s85
      %p92 = scmp.eq.s32.totalorder %s33, 1
      %p93 = por %p91, %p92
      %p94 = scmp.ne.s32.totalorder %s85, %s86
      %p95 = scmp.eq.s32.totalorder %s33, 0
      %p96 = por %p94, %p95
      %p97 = scmp.ne.s32.totalorder %s85, %s86
      %p98 = scmp.eq.s32.totalorder %s34, 1
      %p99 = por %p97, %p98
      %p101 = scmp.ne.s32.totalorder %s86, %s100
      %p102 = scmp.eq.s32.totalorder %s34, 0
      %p103 = por %p101, %p102
      %s105 = sadd.s32 %s104, 1
      %p108 = scmp.eq.s32.totalorder %s28, 1
      %p109 = scmp.ne.s32.totalorder %s104, %s106
      %p110 = scmp.eq.s32.totalorder %s28, 0
      %p111 = por %p109, %p110
      %p112 = scmp.ne.s32.totalorder %s104, %s106
      %p113 = scmp.eq.s32.totalorder %s33, 1
      %p114 = por %p112, %p113
      %p115 = scmp.ne.s32.totalorder %s106, %s107
      %p116 = scmp.eq.s32.totalorder %s33, 0
      %p117 = por %p115, %p116
      %p118 = scmp.ne.s32.totalorder %s106, %s107
      %p119 = scmp.eq.s32.totalorder %s34, 1
      %p120 = por %p118, %p119
      %p122 = scmp.ne.s32.totalorder %s107, %s121
      %p123 = scmp.eq.s32.totalorder %s34, 0
      %p124 = por %p122, %p123
      %s126 = sadd.s32 %s125, 1
      %p129 = scmp.eq.s32.totalorder %s28, 1
      %p130 = scmp.ne.s32.totalorder %s125, %s127
      %p131 = scmp.eq.s32.totalorder %s28, 0
      %p132 = por %p130, %p131
      %p133 = scmp.ne.s32.totalorder %s125, %s127
      %p134 = scmp.eq.s32.totalorder %s33, 1
      %p135 = por %p133, %p134
      %p136 = scmp.ne.s32.totalorder %s127, %s128
      %p137 = scmp.eq.s32.totalorder %s33, 0
      %p138 = por %p136, %p137
      %p139 = scmp.ne.s32.totalorder %s127, %s128
      %p140 = scmp.eq.s32.totalorder %s34, 1
      %p141 = por %p139, %p140
      %p143 = scmp.ne.s32.totalorder %s128, %s142
      %p144 = scmp.eq.s32.totalorder %s34, 0
      %p145 = por %p143, %p144
      %s147 = sadd.s32 %s146, 1
      %p150 = scmp.eq.s32.totalorder %s28, 1
      %p151 = scmp.ne.s32.totalorder %s146, %s148
      %p152 = scmp.eq.s32.totalorder %s28, 0
      %p153 = por %p151, %p152
      %p154 = scmp.ne.s32.totalorder %s146, %s148
      %p155 = scmp.eq.s32.totalorder %s33, 1
      %p156 = por %p154, %p155
      %p157 = scmp.ne.s32.totalorder %s148, %s149
      %p158 = scmp.eq.s32.totalorder %s33, 0
      %p159 = por %p157, %p158
      %p160 = scmp.ne.s32.totalorder %s148, %s149
      %p161 = scmp.eq.s32.totalorder %s34, 1
      %p162 = por %p160, %p161
      %p164 = scmp.ne.s32.totalorder %s149, %s163
      %p165 = scmp.eq.s32.totalorder %s34, 0
      %p166 = por %p164, %p165
      %s168 = sadd.s32 %s167, 1
      %p171 = scmp.eq.s32.totalorder %s28, 1
      %p172 = scmp.ne.s32.totalorder %s167, %s169
      %p173 = scmp.eq.s32.totalorder %s28, 0
      %p174 = por %p172, %p173
      %p175 = scmp.ne.s32.totalorder %s167, %s169
      %p176 = scmp.eq.s32.totalorder %s33, 1
      %p177 = por %p175, %p176
      %p178 = scmp.ne.s32.totalorder %s169, %s170
      %p179 = scmp.eq.s32.totalorder %s33, 0
      %p180 = por %p178, %p179
      %p181 = scmp.ne.s32.totalorder %s169, %s170
      %p182 = scmp.eq.s32.totalorder %s34, 1
      %p183 = por %p181, %p182
      %p185 = scmp.ne.s32.totalorder %s170, %s184
      %p186 = scmp.eq.s32.totalorder %s34, 0
      %p187 = por %p185, %p186
      %s189 = sadd.s32 %s188, 1
      %p192 = scmp.eq.s32.totalorder %s28, 1
      %p193 = scmp.ne.s32.totalorder %s188, %s190
      %p194 = scmp.eq.s32.totalorder %s28, 0
      %p195 = por %p193, %p194
      %p196 = scmp.ne.s32.totalorder %s188, %s190
      %p197 = scmp.eq.s32.totalorder %s33, 1
      %p198 = por %p196, %p197
      %p199 = scmp.ne.s32.totalorder %s190, %s191
      %p200 = scmp.eq.s32.totalorder %s33, 0
      %p201 = por %p199, %p200
      %p202 = scmp.ne.s32.totalorder %s190, %s191
      %p203 = scmp.eq.s32.totalorder %s34, 1
      %p204 = por %p202, %p203
      %p206 = scmp.ne.s32.totalorder %s191, %s205
      %p207 = scmp.eq.s32.totalorder %s34, 0
      %p208 = por %p206, %p207
      %s210 = sadd.s32 %s209, 1
      %p213 = scmp.eq.s32.totalorder %s28, 1
      %p214 = scmp.ne.s32.totalorder %s209, %s211
      %p215 = scmp.eq.s32.totalorder %s28, 0
      %p216 = por %p214, %p215
      %p217 = scmp.ne.s32.totalorder %s209, %s211
      %p218 = scmp.eq.s32.totalorder %s33, 1
      %p219 = por %p217, %p218
      %p220 = scmp.ne.s32.totalorder %s211, %s212
      %p221 = scmp.eq.s32.totalorder %s33, 0
      %p222 = por %p220, %p221
      %p223 = scmp.ne.s32.totalorder %s211, %s212
      %p224 = scmp.eq.s32.totalorder %s34, 1
      %p225 = por %p223, %p224
      %p227 = scmp.ne.s32.totalorder %s212, %s226
      %p228 = scmp.eq.s32.totalorder %s34, 0
      %p229 = por %p227, %p228
      %s231 = sadd.s32 %s230, 1
      %p234 = scmp.eq.s32.totalorder %s28, 1
      %p235 = scmp.ne.s32.totalorder %s230, %s232
      %p236 = scmp.eq.s32.totalorder %s28, 0
      %p237 = por %p235, %p236
      %p238 = scmp.ne.s32.totalorder %s230, %s232
      %p239 = scmp.eq.s32.totalorder %s33, 1
      %p240 = por %p238, %p239
      %p241 = scmp.ne.s32.totalorder %s232, %s233
      %p242 = scmp.eq.s32.totalorder %s33, 0
      %p243 = por %p241, %p242
      %p244 = scmp.ne.s32.totalorder %s232, %s233
      %p245 = scmp.eq.s32.totalorder %s34, 1
      %p246 = por %p244, %p245
      %p248 = scmp.ne.s32.totalorder %s233, %s247
      %p249 = scmp.eq.s32.totalorder %s34, 0
      %p250 = por %p248, %p249
      %s252 = sadd.s32 %s251, 1
      %p255 = scmp.eq.s32.totalorder %s28, 1
      %p256 = scmp.ne.s32.totalorder %s251, %s253
      %p257 = scmp.eq.s32.totalorder %s28, 0
      %p258 = por %p256, %p257
      %p259 = scmp.ne.s32.totalorder %s251, %s253
      %p260 = scmp.eq.s32.totalorder %s33, 1
      %p261 = por %p259, %p260
      %p262 = scmp.ne.s32.totalorder %s253, %s254
      %p263 = scmp.eq.s32.totalorder %s33, 0
      %p264 = por %p262, %p263
      %p265 = scmp.ne.s32.totalorder %s253, %s254
      %p266 = scmp.eq.s32.totalorder %s34, 1
      %p267 = por %p265, %p266
      %p269 = scmp.ne.s32.totalorder %s254, %s268
      %p270 = scmp.eq.s32.totalorder %s34, 0
      %p271 = por %p269, %p270
      %s273 = sadd.s32 %s272, 1
      %p276 = scmp.eq.s32.totalorder %s28, 1
      %p277 = scmp.ne.s32.totalorder %s272, %s274
      %p278 = scmp.eq.s32.totalorder %s28, 0
      %p279 = por %p277, %p278
      %p280 = scmp.ne.s32.totalorder %s272, %s274
      %p281 = scmp.eq.s32.totalorder %s33, 1
      %p282 = por %p280, %p281
      %p283 = scmp.ne.s32.totalorder %s274, %s275
      %p284 = scmp.eq.s32.totalorder %s33, 0
      %p285 = por %p283, %p284
      %p286 = scmp.ne.s32.totalorder %s274, %s275
      %p287 = scmp.eq.s32.totalorder %s34, 1
      %p288 = por %p286, %p287
      %p290 = scmp.ne.s32.totalorder %s275, %s289
      %p291 = scmp.eq.s32.totalorder %s34, 0
      %p292 = por %p290, %p291
      %s294 = sadd.s32 %s293, 1
      %p297 = scmp.eq.s32.totalorder %s28, 1
      %p298 = scmp.ne.s32.totalorder %s293, %s295
      %p299 = scmp.eq.s32.totalorder %s28, 0
      %p300 = por %p298, %p299
      %p301 = scmp.ne.s32.totalorder %s293, %s295
      %p302 = scmp.eq.s32.totalorder %s33, 1
      %p303 = por %p301, %p302
      %p304 = scmp.ne.s32.totalorder %s295, %s296
      %p305 = scmp.eq.s32.totalorder %s33, 0
      %p306 = por %p304, %p305
      %p307 = scmp.ne.s32.totalorder %s295, %s296
      %p308 = scmp.eq.s32.totalorder %s34, 1
      %p309 = por %p307, %p308
      %p311 = scmp.ne.s32.totalorder %s296, %s310
      %p312 = scmp.eq.s32.totalorder %s34, 0
      %p313 = por %p311, %p312
      %s315 = sadd.s32 %s314, 1
      %p318 = scmp.eq.s32.totalorder %s28, 1
      %p319 = scmp.ne.s32.totalorder %s314, %s316
      %p320 = scmp.eq.s32.totalorder %s28, 0
      %p321 = por %p319, %p320
      %p322 = scmp.ne.s32.totalorder %s314, %s316
      %p323 = scmp.eq.s32.totalorder %s33, 1
      %p324 = por %p322, %p323
      %p325 = scmp.ne.s32.totalorder %s316, %s317
      %p326 = scmp.eq.s32.totalorder %s33, 0
      %p327 = por %p325, %p326
      %p328 = scmp.ne.s32.totalorder %s316, %s317
      %p329 = scmp.eq.s32.totalorder %s34, 1
      %p330 = por %p328, %p329
      %p332 = scmp.ne.s32.totalorder %s317, %s331
      %p333 = scmp.eq.s32.totalorder %s34, 0
      %p334 = por %p332, %p333
      %s336 = sadd.s32 %s335, 1
      %p339 = scmp.eq.s32.totalorder %s28, 1
      %p340 = scmp.ne.s32.totalorder %s335, %s337
      %p341 = scmp.eq.s32.totalorder %s28, 0
      %p342 = por %p340, %p341
      %p343 = scmp.ne.s32.totalorder %s335, %s337
      %p344 = scmp.eq.s32.totalorder %s33, 1
      %p345 = por %p343, %p344
      %p346 = scmp.ne.s32.totalorder %s337, %s338
      %p347 = scmp.eq.s32.totalorder %s33, 0
      %p348 = por %p346, %p347
      %p349 = scmp.ne.s32.totalorder %s337, %s338
      %p350 = scmp.eq.s32.totalorder %s34, 1
      %p351 = por %p349, %p350
      %p353 = scmp.ne.s32.totalorder %s338, %s352
      %p354 = scmp.eq.s32.totalorder %s34, 0
      %p355 = por %p353, %p354
      %s357 = sadd.s32 %s356, 1
      %p360 = scmp.eq.s32.totalorder %s28, 1
      %p361 = scmp.ne.s32.totalorder %s356, %s358
      %p362 = scmp.eq.s32.totalorder %s28, 0
      %p363 = por %p361, %p362
      %p364 = scmp.ne.s32.totalorder %s356, %s358
      %p365 = scmp.eq.s32.totalorder %s33, 1
      %p366 = por %p364, %p365
      %p367 = scmp.ne.s32.totalorder %s358, %s359
      %p368 = scmp.eq.s32.totalorder %s33, 0
      %p369 = por %p367, %p368
      %p370 = scmp.ne.s32.totalorder %s358, %s359
      %p371 = scmp.eq.s32.totalorder %s34, 1
      %p372 = por %p370, %p371
      %p374 = scmp.ne.s32.totalorder %s359, %s373
      %p375 = scmp.eq.s32.totalorder %s34, 0
      %p376 = por %p374, %p375
      %s377 = ssub.s32 %s28, %s35
      %p378 = scmp.eq.s32.totalorder %s377, 0
      %s380 = sadd.s32 %s379, 1
      %s381 = scalar_select %p378, %s379, %s380
      %p384 = pneg %p378
      %p385 = scmp.eq.s32.totalorder %s28, 1
      %p386 = por %p384, %p385
      %p387 = scmp.ne.s32.totalorder %s379, %s382
      %p388 = scmp.eq.s32.totalorder %s28, 0
      %p389 = por %p387, %p388
      %p390 = scmp.ne.s32.totalorder %s379, %s382
      %p391 = scmp.eq.s32.totalorder %s33, 1
      %p392 = por %p390, %p391
      %p393 = scmp.ne.s32.totalorder %s382, %s383
      %p394 = scmp.eq.s32.totalorder %s33, 0
      %p395 = por %p393, %p394
      %p396 = scmp.ne.s32.totalorder %s382, %s383
      %p397 = scmp.eq.s32.totalorder %s34, 1
      %p398 = por %p396, %p397
      %p400 = scmp.ne.s32.totalorder %s383, %s399
      %p401 = scmp.eq.s32.totalorder %s34, 0
      %p402 = por %p400, %p401
      %p403 = scmp.le.s32.totalorder 1, %s28
      %p404 = scmp.lt.s32.totalorder %s28, 3
      %p405 = pnand %p403, %p404
      %p406 = pneg %p405
      // Predicated region
      $region9: #{forward.1} parent=5 // pred_check
        _
      $region10: #{forward.1} parent=5 // pred_check_branch
        %408 = sbr.rel (%p405) target = $region12
      $region11: #{forward.1} parent=5 // pred_region
        %s409 = ssub.s32 %s28, 1
        // Predicated region
        $region13: #{forward.1} parent=11 // pred_check
          %p410 = pneg %p75
        $region14: #{forward.1} parent=11 // pred_check_branch
          %412 = sbr.rel (%p410) target = $region16
        $region15: #{forward.1} parent=11 // pred_region
          %s414 = ssub.s32 4096, 4096
          %415 = vsyncadd [#allocation3], %s414
          %s416 = sshll.u32 [#allocation2], 4
          %s417 = int_to_ptr.vmem [resolvable:$true] %s416
          %422 = dma.hbm_to_vmem [thread:$0]  %s1, 4096, %s417, [#allocation3], 128, 128, 8
        $region16: #{forward.1} parent=11 // pred_fallthru
          _
        // Predicated region
        $region17: #{forward.1} parent=11 // pred_check
          %p423 = pneg %p96
        $region18: #{forward.1} parent=11 // pred_check_branch
          %425 = sbr.rel (%p423) target = $region20
        $region19: #{forward.1} parent=11 // pred_region
          _
        $region20: #{forward.1} parent=11 // pred_fallthru
          _
        // Predicated region
        $region21: #{forward.1} parent=11 // pred_check
          %p426 = pneg %p117
        $region22: #{forward.1} parent=11 // pred_check_branch
          %428 = sbr.rel (%p426) target = $region24
        $region23: #{forward.1} parent=11 // pred_region
          _
        $region24: #{forward.1} parent=11 // pred_fallthru
          _
        // Predicated region
        $region25: #{forward.1} parent=11 // pred_check
          %p429 = pneg %p138
        $region26: #{forward.1} parent=11 // pred_check_branch
          %431 = sbr.rel (%p429) target = $region28
        $region27: #{forward.1} parent=11 // pred_region
          %s433 = ssub.s32 2048, 2048
          %434 = vsyncadd [#allocation6], %s433
          %s435 = sshll.u32 [#allocation5], 4
          %s436 = int_to_ptr.vmem [resolvable:$true] %s435
          %441 = dma.hbm_to_vmem [thread:$0]  %s4, 2048, %s436, [#allocation6], 64, 64, 4
        $region28: #{forward.1} parent=11 // pred_fallthru
          _
        // Predicated region
        $region29: #{forward.1} parent=11 // pred_check
          %p442 = pneg %p159
        $region30: #{forward.1} parent=11 // pred_check_branch
          %444 = sbr.rel (%p442) target = $region32
        $region31: #{forward.1} parent=11 // pred_region
          _
        $region32: #{forward.1} parent=11 // pred_fallthru
          _
        // Predicated region
        $region33: #{forward.1} parent=11 // pred_check
          %p445 = pneg %p180
        $region34: #{forward.1} parent=11 // pred_check_branch
          %447 = sbr.rel (%p445) target = $region36
        $region35: #{forward.1} parent=11 // pred_region
          _
        $region36: #{forward.1} parent=11 // pred_fallthru
          _
        // Predicated region
        $region37: #{forward.1} parent=11 // pred_check
          %p448 = pneg %p201
        $region38: #{forward.1} parent=11 // pred_check_branch
          %450 = sbr.rel (%p448) target = $region40
        $region39: #{forward.1} parent=11 // pred_region
          _
        $region40: #{forward.1} parent=11 // pred_fallthru
          _
        // Predicated region
        $region41: #{forward.1} parent=11 // pred_check
          %p451 = pneg %p222
        $region42: #{forward.1} parent=11 // pred_check_branch
          %453 = sbr.rel (%p451) target = $region44
        $region43: #{forward.1} parent=11 // pred_region
          %s455 = ssub.s32 8192, 8192
          %456 = vsyncadd [#allocation6], %s455
          %s457 = sshll.u32 [#allocation7], 4
          %s458 = int_to_ptr.vmem [resolvable:$true] %s457
          %463 = dma.hbm_to_vmem [thread:$0]  %s8, 8192, %s458, [#allocation6], 256, 256, 16
        $region44: #{forward.1} parent=11 // pred_fallthru
          _
        // Predicated region
        $region45: #{forward.1} parent=11 // pred_check
          %p464 = pneg %p243
        $region46: #{forward.1} parent=11 // pred_check_branch
          %466 = sbr.rel (%p464) target = $region48
        $region47: #{forward.1} parent=11 // pred_region
          _
        $region48: #{forward.1} parent=11 // pred_fallthru
          _
        // Predicated region
        $region49: #{forward.1} parent=11 // pred_check
          %p467 = pneg %p264
        $region50: #{forward.1} parent=11 // pred_check_branch
          %469 = sbr.rel (%p467) target = $region52
        $region51: #{forward.1} parent=11 // pred_region
          %s471 = ssub.s32 8192, 8192
          %472 = vsyncadd [#allocation9], %s471
          %s473 = sshll.u32 [#allocation8], 4
          %s474 = int_to_ptr.vmem [resolvable:$true] %s473
          %479 = dma.hbm_to_vmem [thread:$0]  %s10, 8192, %s474, [#allocation9], 64, 64, 4
        $region52: #{forward.1} parent=11 // pred_fallthru
          _
        // Predicated region
        $region53: #{forward.1} parent=11 // pred_check
          %p480 = pneg %p285
        $region54: #{forward.1} parent=11 // pred_check_branch
          %482 = sbr.rel (%p480) target = $region56
        $region55: #{forward.1} parent=11 // pred_region
          _
        $region56: #{forward.1} parent=11 // pred_fallthru
          _
        // Predicated region
        $region57: #{forward.1} parent=11 // pred_check
          %p483 = pneg %p306
        $region58: #{forward.1} parent=11 // pred_check_branch
          %485 = sbr.rel (%p483) target = $region60
        $region59: #{forward.1} parent=11 // pred_region
          _
        $region60: #{forward.1} parent=11 // pred_fallthru
          _
        // Predicated region
        $region61: #{forward.1} parent=11 // pred_check
          %p486 = pneg %p327
        $region62: #{forward.1} parent=11 // pred_check_branch
          %488 = sbr.rel (%p486) target = $region64
        $region63: #{forward.1} parent=11 // pred_region
          _
        $region64: #{forward.1} parent=11 // pred_fallthru
          _
        // Predicated region
        $region65: #{forward.1} parent=11 // pred_check
          %p489 = pneg %p348
        $region66: #{forward.1} parent=11 // pred_check_branch
          %491 = sbr.rel (%p489) target = $region68
        $region67: #{forward.1} parent=11 // pred_region
          %s493 = ssub.s32 2048, 2048
          %494 = vsyncadd [#allocation9], %s493
          %s495 = sshll.u32 [#allocation10], 4
          %s496 = int_to_ptr.vmem [resolvable:$true] %s495
          %501 = dma.hbm_to_vmem [thread:$0]  %s14, 2048, %s496, [#allocation9], 128, 128, 8
        $region68: #{forward.1} parent=11 // pred_fallthru
          _
        // Predicated region
        $region69: #{forward.1} parent=11 // pred_check
          %p502 = pneg %p369
        $region70: #{forward.1} parent=11 // pred_check_branch
          %504 = sbr.rel (%p502) target = $region72
        $region71: #{forward.1} parent=11 // pred_region
          _
        $region72: #{forward.1} parent=11 // pred_fallthru
          _
      $region12: #{forward.1} parent=5 // pred_fallthru
        _
      %p505 = scmp.lt.s32.totalorder %s28, 2
      // Predicated region
      $region73: #{forward.1} parent=5 // pred_check
        %p506 = pneg %p505
      $region74: #{forward.1} parent=5 // pred_check_branch
        %508 = sbr.rel (%p506) target = $region76
      $region75: #{forward.1} parent=5 // pred_region
        // Predicated region
        $region77: #{forward.1} parent=75 // pred_check
          %p509 = pneg %p48
        $region78: #{forward.1} parent=75 // pred_check_branch
          %511 = sbr.rel (%p509) target = $region80
        $region79: #{forward.1} parent=75 // pred_region
          %p512 = scmp.lt.s32.totalorder %s28, 1
          %s513 = scalar_select %p512, %s28, 1
          %s514 = smul.addr %s513, 8
          %s515 = scalar_lea.vmem %s0, %s514
        $region80: #{forward.1} parent=75 // pred_fallthru
          _
      $region76: #{forward.1} parent=5 // pred_fallthru
        _
      %p516 = scmp.le.s32.totalorder 1, %s28
      %p517 = scmp.lt.s32.totalorder %s28, 3
      %p518 = pnand %p516, %p517
      %p519 = pneg %p518
      // Predicated region
      $region81: #{forward.1} parent=5 // pred_check
        _
      $region82: #{forward.1} parent=5 // pred_check_branch
        %521 = sbr.rel (%p518) target = $region84
      $region83: #{forward.1} parent=5 // pred_region
        %s522 = ssub.s32 %s28, 1
        // Predicated region
        $region85: #{forward.1} parent=83 // pred_check
          %p523 = pneg %p75
        $region86: #{forward.1} parent=83 // pred_check_branch
          %525 = sbr.rel (%p523) target = $region88
        $region87: #{forward.1} parent=83 // pred_region
          %526 = dma.done [#allocation3], 4096
        $region88: #{forward.1} parent=83 // pred_fallthru
          _
        // Predicated region
        $region89: #{forward.1} parent=83 // pred_check
          %p527 = pneg %p138
        $region90: #{forward.1} parent=83 // pred_check_branch
          %529 = sbr.rel (%p527) target = $region92
        $region91: #{forward.1} parent=83 // pred_region
          %530 = dma.done [#allocation6], 2048
        $region92: #{forward.1} parent=83 // pred_fallthru
          _
        // Predicated region
        $region93: #{forward.1} parent=83 // pred_check
          %p531 = pneg %p222
        $region94: #{forward.1} parent=83 // pred_check_branch
          %533 = sbr.rel (%p531) target = $region96
        $region95: #{forward.1} parent=83 // pred_region
          %534 = dma.done [#allocation6], 8192
        $region96: #{forward.1} parent=83 // pred_fallthru
          _
        // Predicated region
        $region97: #{forward.1} parent=83 // pred_check
          %p535 = pneg %p264
        $region98: #{forward.1} parent=83 // pred_check_branch
          %537 = sbr.rel (%p535) target = $region100
        $region99: #{forward.1} parent=83 // pred_region
          %538 = dma.done [#allocation9], 8192
        $region100: #{forward.1} parent=83 // pred_fallthru
          _
        // Predicated region
        $region101: #{forward.1} parent=83 // pred_check
          %p539 = pneg %p348
        $region102: #{forward.1} parent=83 // pred_check_branch
          %541 = sbr.rel (%p539) target = $region104
        $region103: #{forward.1} parent=83 // pred_region
          %542 = dma.done [#allocation9], 2048
        $region104: #{forward.1} parent=83 // pred_fallthru
          _
        %p543 = scmp.lt.s32.totalorder %s33, 1
        %s544 = scalar_select %p543, %s33, 1
        %s545 = smul.addr %s544, 8
        %s546 = scalar_lea.vmem %s0, %s545
        %p547 = pneg %p54
        %p548 = pneg %p51
        %p549 = pneg %p75
        %p550 = pneg %p72
        %p551 = pneg %p96
        %p552 = pneg %p93
        %p553 = pneg %p117
        %p554 = pneg %p114
        %p555 = pneg %p138
        %p556 = pneg %p135
        %p557 = pneg %p159
        %p558 = pneg %p156
        %p559 = pneg %p180
        %p560 = pneg %p177
        %p561 = pneg %p201
        %p562 = pneg %p198
        %p563 = pneg %p222
        %p564 = pneg %p219
        %p565 = pneg %p243
        %p566 = pneg %p240
        %p567 = pneg %p264
        %p568 = pneg %p261
        %p569 = pneg %p285
        %p570 = pneg %p282
        %p571 = pneg %p306
        %p572 = pneg %p303
        %p573 = pneg %p327
        %p574 = pneg %p324
        %p575 = pneg %p348
        %p576 = pneg %p345
        %p577 = pneg %p369
        %p578 = pneg %p366
        %p579 = pneg %p395
        %p580 = pneg %p392
        %s581 = sand.u32 %s382, 1
        %s582 = scalar_lea.sflag [#allocation4], %s581
        %s583 = sand.u32 %s382, 1
        %s584 = smul.addr %s583, 16
        %s585 = scalar_lea.vmem [#allocation11], %s584
        %p586 = scmp.lt.s32.totalorder %s33, 1
        %s587 = scalar_select %p586, %s33, 1
        %s588 = smul.addr %s587, 8
        %s589 = scalar_lea.vmem %s0, %s588
        %v591 = vld [vmem:[%s589] sm:$0xff]
        %v592 = vlaneseq
        %v593 = vand.u32 %v592, 127
        %v594 = vadd.s32 %v593, 128
        %595 = vset.pattern.permute.xlu0 0
        %596 = vperm.xlu0 %595, %v591
        %v597 = vpop.permute.xlu0 %596
        %vm598 = vcmp.eq.s32.totalorder %v593, %v597
        %vm599 = vcmp.eq.s32.totalorder %v594, %v597
        %v600 = vsel %vm598, 1, 0
        %v601 = vsel %vm599, 1, 0
        %v602 = vcvt.s32.f32 %v600
        %v603 = vcvt.s32.f32 %v601
        %v604 = vld [vmem:[#allocation2] sm:$0xff]
        %v605 = vld [vmem:[#allocation2 + $0x8] sm:$0xff]
        %v606 = vld [vmem:[#allocation2 + $0x10] sm:$0xff]
        %v607 = vld [vmem:[#allocation2 + $0x18] sm:$0xff]
        %v608 = vld [vmem:[#allocation2 + $0x20] sm:$0xff]
        %v609 = vld [vmem:[#allocation2 + $0x28] sm:$0xff]
        %v610 = vld [vmem:[#allocation2 + $0x30] sm:$0xff]
        %v611 = vld [vmem:[#allocation2 + $0x38] sm:$0xff]
        %v612 = vld [vmem:[#allocation2 + $0x40] sm:$0xff]
        %v613 = vld [vmem:[#allocation2 + $0x48] sm:$0xff]
        %v614 = vld [vmem:[#allocation2 + $0x50] sm:$0xff]
        %v615 = vld [vmem:[#allocation2 + $0x58] sm:$0xff]
        %v616 = vld [vmem:[#allocation2 + $0x60] sm:$0xff]
        %v617 = vld [vmem:[#allocation2 + $0x68] sm:$0xff]
        %v618 = vld [vmem:[#allocation2 + $0x70] sm:$0xff]
        %v619 = vld [vmem:[#allocation2 + $0x78] sm:$0xff]
        %v620 = vld [vmem:[#allocation2 + $0x80] sm:$0xff]
        %v621 = vld [vmem:[#allocation2 + $0x88] sm:$0xff]
        %v622 = vld [vmem:[#allocation2 + $0x90] sm:$0xff]
        %v623 = vld [vmem:[#allocation2 + $0x98] sm:$0xff]
        %v624 = vld [vmem:[#allocation2 + $0xa0] sm:$0xff]
        %v625 = vld [vmem:[#allocation2 + $0xa8] sm:$0xff]
        %v626 = vld [vmem:[#allocation2 + $0xb0] sm:$0xff]
        %v627 = vld [vmem:[#allocation2 + $0xb8] sm:$0xff]
        %v628 = vld [vmem:[#allocation2 + $0xc0] sm:$0xff]
        %v629 = vld [vmem:[#allocation2 + $0xc8] sm:$0xff]
        %v630 = vld [vmem:[#allocation2 + $0xd0] sm:$0xff]
        %v631 = vld [vmem:[#allocation2 + $0xd8] sm:$0xff]
        %v632 = vld [vmem:[#allocation2 + $0xe0] sm:$0xff]
        %v633 = vld [vmem:[#allocation2 + $0xe8] sm:$0xff]
        %v634 = vld [vmem:[#allocation2 + $0xf0] sm:$0xff]
        %v635 = vld [vmem:[#allocation2 + $0xf8] sm:$0xff]
        %636 = vmatprep.subr.mxu0 0.0
        %637 = vmatpush1.msra.mxu0 %v619
        %638 = vmatprep.subr.mxu0 0.0
        %639 = vmatpush1.msra.mxu0 %v618
        %640 = vmatprep.subr.mxu0 0.0
        %641 = vmatpush1.msra.mxu0 %v617
        %642 = vmatprep.subr.mxu0 0.0
        %643 = vmatpush1.msra.mxu0 %v616
        %644 = vmatprep.subr.mxu0 0.0
        %645 = vmatpush1.msra.mxu0 %v615
        %646 = vmatprep.subr.mxu0 0.0
        %647 = vmatpush1.msra.mxu0 %v614
        %648 = vmatprep.subr.mxu0 0.0
        %649 = vmatpush1.msra.mxu0 %v613
        %650 = vmatprep.subr.mxu0 0.0
        %651 = vmatpush1.msra.mxu0 %v612
        %652 = vmatprep.subr.mxu0 0.0
        %653 = vmatpush1.msra.mxu0 %v611
        %654 = vmatprep.subr.mxu0 0.0
        %655 = vmatpush1.msra.mxu0 %v610
        %656 = vmatprep.subr.mxu0 0.0
        %657 = vmatpush1.msra.mxu0 %v609
        %658 = vmatprep.subr.mxu0 0.0
        %659 = vmatpush1.msra.mxu0 %v608
        %660 = vmatprep.subr.mxu0 0.0
        %661 = vmatpush1.msra.mxu0 %v607
        %662 = vmatprep.subr.mxu0 0.0
        %663 = vmatpush1.msra.mxu0 %v606
        %664 = vmatprep.subr.mxu0 0.0
        %665 = vmatpush1.msra.mxu0 %v605
        %666 = vmatprep.subr.mxu0 0.0
        %667 = vmatpush1.msra.mxu0 %v604
        %668 = vmatprep.subr.mxu0 0.0
        %669 = vmatpush2.msra.mxu0 %v635
        %670 = vmatprep.subr.mxu0 0.0
        %671 = vmatpush2.msra.mxu0 %v634
        %672 = vmatprep.subr.mxu0 0.0
        %673 = vmatpush2.msra.mxu0 %v633
        %674 = vmatprep.subr.mxu0 0.0
        %675 = vmatpush2.msra.mxu0 %v632
        %676 = vmatprep.subr.mxu0 0.0
        %677 = vmatpush2.msra.mxu0 %v631
        %678 = vmatprep.subr.mxu0 0.0
        %679 = vmatpush2.msra.mxu0 %v630
        %680 = vmatprep.subr.mxu0 0.0
        %681 = vmatpush2.msra.mxu0 %v629
        %682 = vmatprep.subr.mxu0 0.0
        %683 = vmatpush2.msra.mxu0 %v628
        %684 = vmatprep.subr.mxu0 0.0
        %685 = vmatpush2.msra.mxu0 %v627
        %686 = vmatprep.subr.mxu0 0.0
        %687 = vmatpush2.msra.mxu0 %v626
        %688 = vmatprep.subr.mxu0 0.0
        %689 = vmatpush2.msra.mxu0 %v625
        %690 = vmatprep.subr.mxu0 0.0
        %691 = vmatpush2.msra.mxu0 %v624
        %692 = vmatprep.subr.mxu0 0.0
        %693 = vmatpush2.msra.mxu0 %v623
        %694 = vmatprep.subr.mxu0 0.0
        %695 = vmatpush2.msra.mxu0 %v622
        %696 = vmatprep.subr.mxu0 0.0
        %697 = vmatpush2.msra.mxu0 %v621
        %698 = vmatprep.subr.mxu0 0.0
        %699 = vmatpush2.msra.mxu0 %v620
        %700 = vmatprep.mubr.f32.mxu0 %v603
        %701 = vmatmul.mubr.f32.gmra.mxu0 %v602
        %v702 = vpop.f32.mrf.mxu0
        %v703 = vadd.f32 0.0, %v702
        %v704 = vpop.f32.mrf.mxu0
        %705 = vdwg.mxu0
        %v706 = vld [vmem:[%s2] sm:$0x1]
        %v707 = vld [vmem:[%s3] sm:$0x1]
        %v708 = vld [vmem:[#allocation5] sm:$0xf]
        %v709 = vld [vmem:[#allocation5 + $0x4] sm:$0xf]
        %v710 = vld [vmem:[#allocation5 + $0x8] sm:$0xf]
        %v711 = vld [vmem:[#allocation5 + $0xc] sm:$0xf]
        %v712 = vld [vmem:[#allocation5 + $0x10] sm:$0xf]
        %v713 = vld [vmem:[#allocation5 + $0x14] sm:$0xf]
        %v714 = vld [vmem:[#allocation5 + $0x18] sm:$0xf]
        %v715 = vld [vmem:[#allocation5 + $0x1c] sm:$0xf]
        %v716 = vld [vmem:[#allocation5 + $0x20] sm:$0xf]
        %v717 = vld [vmem:[#allocation5 + $0x24] sm:$0xf]
        %v718 = vld [vmem:[#allocation5 + $0x28] sm:$0xf]
        %v719 = vld [vmem:[#allocation5 + $0x2c] sm:$0xf]
        %v720 = vld [vmem:[#allocation5 + $0x30] sm:$0xf]
        %v721 = vld [vmem:[#allocation5 + $0x34] sm:$0xf]
        %v722 = vld [vmem:[#allocation5 + $0x38] sm:$0xf]
        %v723 = vld [vmem:[#allocation5 + $0x3c] sm:$0xf]
        %v724 = vld [vmem:[%s5] sm:$0x1]
        %v725 = vld [vmem:[%s6] sm:$0x1]
        %v726 = vld [vmem:[%s7] sm:$0x1]
        %v727 = vld [vmem:[#allocation7] sm:$0xff]
        %v728 = vld [vmem:[#allocation7 + $0x8] sm:$0xff]
        %v729 = vld [vmem:[#allocation7 + $0x10] sm:$0xff]
        %v730 = vld [vmem:[#allocation7 + $0x18] sm:$0xff]
        %v731 = vld [vmem:[#allocation7 + $0x20] sm:$0xff]
        %v732 = vld [vmem:[#allocation7 + $0x28] sm:$0xff]
        %v733 = vld [vmem:[#allocation7 + $0x30] sm:$0xff]
        %v734 = vld [vmem:[#allocation7 + $0x38] sm:$0xff]
        %v735 = vld [vmem:[#allocation7 + $0x40] sm:$0xff]
        %v736 = vld [vmem:[#allocation7 + $0x48] sm:$0xff]
        %v737 = vld [vmem:[#allocation7 + $0x50] sm:$0xff]
        %v738 = vld [vmem:[#allocation7 + $0x58] sm:$0xff]
        %v739 = vld [vmem:[#allocation7 + $0x60] sm:$0xff]
        %v740 = vld [vmem:[#allocation7 + $0x68] sm:$0xff]
        %v741 = vld [vmem:[#allocation7 + $0x70] sm:$0xff]
        %v742 = vld [vmem:[#allocation7 + $0x78] sm:$0xff]
        %v743 = vld [vmem:[#allocation7 + $0x80] sm:$0xff]
        %v744 = vld [vmem:[#allocation7 + $0x88] sm:$0xff]
        %v745 = vld [vmem:[#allocation7 + $0x90] sm:$0xff]
        %v746 = vld [vmem:[#allocation7 + $0x98] sm:$0xff]
        %v747 = vld [vmem:[#allocation7 + $0xa0] sm:$0xff]
        %v748 = vld [vmem:[#allocation7 + $0xa8] sm:$0xff]
        %v749 = vld [vmem:[#allocation7 + $0xb0] sm:$0xff]
        %v750 = vld [vmem:[#allocation7 + $0xb8] sm:$0xff]
        %v751 = vld [vmem:[#allocation7 + $0xc0] sm:$0xff]
        %v752 = vld [vmem:[#allocation7 + $0xc8] sm:$0xff]
        %v753 = vld [vmem:[#allocation7 + $0xd0] sm:$0xff]
        %v754 = vld [vmem:[#allocation7 + $0xd8] sm:$0xff]
        %v755 = vld [vmem:[#allocation7 + $0xe0] sm:$0xff]
        %v756 = vld [vmem:[#allocation7 + $0xe8] sm:$0xff]
        %v757 = vld [vmem:[#allocation7 + $0xf0] sm:$0xff]
        %v758 = vld [vmem:[#allocation7 + $0xf8] sm:$0xff]
        %v759 = vld [vmem:[%s9] ss:$2 sm:$0xf]
        %v760 = vld [vmem:[#allocation8] sm:$0xf]
        %v761 = vld [vmem:[#allocation8 + $0x4] sm:$0xf]
        %v762 = vld [vmem:[#allocation8 + $0x8] sm:$0xf]
        %v763 = vld [vmem:[#allocation8 + $0xc] sm:$0xf]
        %v764 = vld [vmem:[#allocation8 + $0x10] sm:$0xf]
        %v765 = vld [vmem:[#allocation8 + $0x14] sm:$0xf]
        %v766 = vld [vmem:[#allocation8 + $0x18] sm:$0xf]
        %v767 = vld [vmem:[#allocation8 + $0x1c] sm:$0xf]
        %v768 = vld [vmem:[#allocation8 + $0x20] sm:$0xf]
        %v769 = vld [vmem:[#allocation8 + $0x24] sm:$0xf]
        %v770 = vld [vmem:[#allocation8 + $0x28] sm:$0xf]
        %v771 = vld [vmem:[#allocation8 + $0x2c] sm:$0xf]
        %v772 = vld [vmem:[#allocation8 + $0x30] sm:$0xf]
        %v773 = vld [vmem:[#allocation8 + $0x34] sm:$0xf]
        %v774 = vld [vmem:[#allocation8 + $0x38] sm:$0xf]
        %v775 = vld [vmem:[#allocation8 + $0x3c] sm:$0xf]
        %v776 = vld [vmem:[#allocation8 + $0x40] sm:$0xf]
        %v777 = vld [vmem:[#allocation8 + $0x44] sm:$0xf]
        %v778 = vld [vmem:[#allocation8 + $0x48] sm:$0xf]
        %v779 = vld [vmem:[#allocation8 + $0x4c] sm:$0xf]
        %v780 = vld [vmem:[#allocation8 + $0x50] sm:$0xf]
        %v781 = vld [vmem:[#allocation8 + $0x54] sm:$0xf]
        %v782 = vld [vmem:[#allocation8 + $0x58] sm:$0xf]
        %v783 = vld [vmem:[#allocation8 + $0x5c] sm:$0xf]
        %v784 = vld [vmem:[#allocation8 + $0x60] sm:$0xf]
        %v785 = vld [vmem:[#allocation8 + $0x64] sm:$0xf]
        %v786 = vld [vmem:[#allocation8 + $0x68] sm:$0xf]
        %v787 = vld [vmem:[#allocation8 + $0x6c] sm:$0xf]
        %v788 = vld [vmem:[#allocation8 + $0x70] sm:$0xf]
        %v789 = vld [vmem:[#allocation8 + $0x74] sm:$0xf]
        %v790 = vld [vmem:[#allocation8 + $0x78] sm:$0xf]
        %v791 = vld [vmem:[#allocation8 + $0x7c] sm:$0xf]
        %v792 = vld [vmem:[#allocation8 + $0x80] sm:$0xf]
        %v793 = vld [vmem:[#allocation8 + $0x84] sm:$0xf]
        %v794 = vld [vmem:[#allocation8 + $0x88] sm:$0xf]
        %v795 = vld [vmem:[#allocation8 + $0x8c] sm:$0xf]
        %v796 = vld [vmem:[#allocation8 + $0x90] sm:$0xf]
        %v797 = vld [vmem:[#allocation8 + $0x94] sm:$0xf]
        %v798 = vld [vmem:[#allocation8 + $0x98] sm:$0xf]
        %v799 = vld [vmem:[#allocation8 + $0x9c] sm:$0xf]
        %v800 = vld [vmem:[#allocation8 + $0xa0] sm:$0xf]
        %v801 = vld [vmem:[#allocation8 + $0xa4] sm:$0xf]
        %v802 = vld [vmem:[#allocation8 + $0xa8] sm:$0xf]
        %v803 = vld [vmem:[#allocation8 + $0xac] sm:$0xf]
        %v804 = vld [vmem:[#allocation8 + $0xb0] sm:$0xf]
        %v805 = vld [vmem:[#allocation8 + $0xb4] sm:$0xf]
        %v806 = vld [vmem:[#allocation8 + $0xb8] sm:$0xf]
        %v807 = vld [vmem:[#allocation8 + $0xbc] sm:$0xf]
        %v808 = vld [vmem:[#allocation8 + $0xc0] sm:$0xf]
        %v809 = vld [vmem:[#allocation8 + $0xc4] sm:$0xf]
        %v810 = vld [vmem:[#allocation8 + $0xc8] sm:$0xf]
        %v811 = vld [vmem:[#allocation8 + $0xcc] sm:$0xf]
        %v812 = vld [vmem:[#allocation8 + $0xd0] sm:$0xf]
        %v813 = vld [vmem:[#allocation8 + $0xd4] sm:$0xf]
        %v814 = vld [vmem:[#allocation8 + $0xd8] sm:$0xf]
        %v815 = vld [vmem:[#allocation8 + $0xdc] sm:$0xf]
        %v816 = vld [vmem:[#allocation8 + $0xe0] sm:$0xf]
        %v817 = vld [vmem:[#allocation8 + $0xe4] sm:$0xf]
        %v818 = vld [vmem:[#allocation8 + $0xe8] sm:$0xf]
        %v819 = vld [vmem:[#allocation8 + $0xec] sm:$0xf]
        %v820 = vld [vmem:[#allocation8 + $0xf0] sm:$0xf]
        %v821 = vld [vmem:[#allocation8 + $0xf4] sm:$0xf]
        %v822 = vld [vmem:[#allocation8 + $0xf8] sm:$0xf]
        %v823 = vld [vmem:[#allocation8 + $0xfc] sm:$0xf]
        %v824 = vld [vmem:[%s11] sm:$0x1]
        %825 = vadd.xlane.f32.xlu0 %v703
        %v826 = vpop.xlane.xlu0 %825
        %v827 = vrcp.pop 128.0
        %v828 = vmul.f32 %v826, %v827
        %v829 = vmul.f32 %v703, %v703
        %830 = vadd.xlane.f32.xlu0 %v829
        %v831 = vpop.xlane.xlu0 %830
        %v832 = vmul.f32 %v831, %v827
        %v833 = vmul.f32 %v828, %v828
        %v834 = vsub.f32 %v832, %v833
        %v835 = vsub.f32 %v703, %v828
        %v836 = vadd.f32 %v834, 1e-05
        %v837 = vrsqrt.pop %v836
        %v838 = vmul.f32 %v835, %v837
        %v839 = vlaneseq
        %v840 = vshrl.u32 %v839, 7
        %v841 = vsub.s32 0, %v840
        %v842 = vrot.slane %v706, %v841
        %v843 = vmul.f32 %v838, %v842
        %v844 = vlaneseq
        %v845 = vshrl.u32 %v844, 7
        %v846 = vsub.s32 0, %v845
        %v847 = vrot.slane %v707, %v846
        %v848 = vadd.f32 %v843, %v847
        %v849 = vpack.c.bf16 %v848, %v848
        %v850 = vlaneseq
        %v851 = vshrl.u32 %v850, 7
        %v852 = vsub.s32 0, %v851
        %v853 = vrot.slane %v724, %v852
        %v870 = vunpack.c.l.b16 %v708
        %v871 = vunpack.c.l.b16 %v709
        %v872 = vunpack.c.l.b16 %v710
        %v873 = vunpack.c.l.b16 %v711
        %v874 = vunpack.c.l.b16 %v712
        %v875 = vunpack.c.l.b16 %v713
        %v876 = vunpack.c.l.b16 %v714
        %v877 = vunpack.c.l.b16 %v715
        %v878 = vunpack.c.l.b16 %v716
        %v879 = vunpack.c.l.b16 %v717
        %v880 = vunpack.c.l.b16 %v718
        %v881 = vunpack.c.l.b16 %v719
        %v882 = vunpack.c.l.b16 %v720
        %v883 = vunpack.c.l.b16 %v721
        %v884 = vunpack.c.l.b16 %v722
        %v885 = vunpack.c.l.b16 %v723
        %v886 = vpack.c.b16 %v871, %v870
        %v887 = vpack.c.b16 %v873, %v872
        %v888 = vpack.c.b16 %v875, %v874
        %v889 = vpack.c.b16 %v877, %v876
        %v890 = vpack.c.b16 %v879, %v878
        %v891 = vpack.c.b16 %v881, %v880
        %v892 = vpack.c.b16 %v883, %v882
        %v893 = vpack.c.b16 %v885, %v884
        %902 = vmatprep.subr.bf16.mxu0 0
        %903 = vmatpush1.bf16.msra.mxu0 %v893
        %904 = vmatprep.subr.bf16.mxu0 0
        %905 = vmatpush1.bf16.msra.mxu0 %v892
        %906 = vmatprep.subr.bf16.mxu0 0
        %907 = vmatpush1.bf16.msra.mxu0 %v891
        %908 = vmatprep.subr.bf16.mxu0 0
        %909 = vmatpush1.bf16.msra.mxu0 %v890
        %910 = vmatprep.subr.bf16.mxu0 0
        %911 = vmatpush1.bf16.msra.mxu0 %v889
        %912 = vmatprep.subr.bf16.mxu0 0
        %913 = vmatpush1.bf16.msra.mxu0 %v888
        %914 = vmatprep.subr.bf16.mxu0 0
        %915 = vmatpush1.bf16.msra.mxu0 %v887
        %916 = vmatprep.subr.bf16.mxu0 0
        %917 = vmatpush1.bf16.msra.mxu0 %v886
        %918 = vmatprep.subr.bf16.mxu0 0
        %919 = vmatpush2.bf16.msra.mxu0 0
        %920 = vmatprep.subr.bf16.mxu0 0
        %921 = vmatpush2.bf16.msra.mxu0 0
        %922 = vmatprep.subr.bf16.mxu0 0
        %923 = vmatpush2.bf16.msra.mxu0 0
        %924 = vmatprep.subr.bf16.mxu0 0
        %925 = vmatpush2.bf16.msra.mxu0 0
        %926 = vmatprep.subr.bf16.mxu0 0
        %927 = vmatpush2.bf16.msra.mxu0 0
        %928 = vmatprep.subr.bf16.mxu0 0
        %929 = vmatpush2.bf16.msra.mxu0 0
        %930 = vmatprep.subr.bf16.mxu0 0
        %931 = vmatpush2.bf16.msra.mxu0 0
        %932 = vmatprep.subr.bf16.mxu0 0
        %933 = vmatpush2.bf16.msra.mxu0 0
        %934 = vmatprep.mubr.bf16.mxu0 0
        %935 = vmatmul.mubr.bf16.gmra.mxu0 %v849
        %v936 = vpop.f32.mrf.mxu0
        %v937 = vadd.f32 %v853, %v936
        %v938 = vpop.f32.mrf.mxu0
        %v939 = vpop.f32.mrf.mxu0
        %v940 = vpop.f32.mrf.mxu0
        %941 = vdwg.mxu0
        %v942 = vadd.f32 %v703, %v937
        %943 = vadd.xlane.f32.xlu0 %v942
        %v944 = vpop.xlane.xlu0 %943
        %v945 = vmul.f32 %v944, %v827
        %v946 = vmul.f32 %v942, %v942
        %947 = vadd.xlane.f32.xlu0 %v946
        %v948 = vpop.xlane.xlu0 %947
        %v949 = vmul.f32 %v948, %v827
        %v950 = vmul.f32 %v945, %v945
        %v951 = vsub.f32 %v949, %v950
        %v952 = vsub.f32 %v942, %v945
        %v953 = vadd.f32 %v951, 1e-05
        %v954 = vrsqrt.pop %v953
        %v955 = vmul.f32 %v952, %v954
        %v956 = vlaneseq
        %v957 = vshrl.u32 %v956, 7
        %v958 = vsub.s32 0, %v957
        %v959 = vrot.slane %v725, %v958
        %v960 = vmul.f32 %v955, %v959
        %v961 = vlaneseq
        %v962 = vshrl.u32 %v961, 7
        %v963 = vsub.s32 0, %v962
        %v964 = vrot.slane %v726, %v963
        %v965 = vadd.f32 %v960, %v964
        %v966 = vpack.c.bf16 %v965, %v965
        %v968 = vlaneseq
        %v969 = vshrl.u32 %v968, 7
        %v970 = vsub.s32 0, %v969
        %v971 = vrot.slane %v759, %v970
        %v972 = vlaneseq
        %v973 = vshrl.u32 %v972, 7
        %v974 = vsub.s32 1, %v973
        %v975 = vrot.slane %v759, %v974
        %v976 = vlaneseq
        %v977 = vshrl.u32 %v976, 7
        %v978 = vsub.s32 2, %v977
        %v979 = vrot.slane %v759, %v978
        %v980 = vlaneseq
        %v981 = vshrl.u32 %v980, 7
        %v982 = vsub.s32 3, %v981
        %v983 = vrot.slane %v759, %v982
        %v1020 = vunpack.c.l.b16 %v727
        %v1021 = vunpack.c.h.b16 %v727
        %v1022 = vunpack.c.l.b16 %v728
        %v1023 = vunpack.c.h.b16 %v728
        %v1024 = vunpack.c.l.b16 %v729
        %v1025 = vunpack.c.h.b16 %v729
        %v1026 = vunpack.c.l.b16 %v730
        %v1027 = vunpack.c.h.b16 %v730
        %v1028 = vunpack.c.l.b16 %v731
        %v1029 = vunpack.c.h.b16 %v731
        %v1030 = vunpack.c.l.b16 %v732
        %v1031 = vunpack.c.h.b16 %v732
        %v1032 = vunpack.c.l.b16 %v733
        %v1033 = vunpack.c.h.b16 %v733
        %v1034 = vunpack.c.l.b16 %v734
        %v1035 = vunpack.c.h.b16 %v734
        %v1036 = vunpack.c.l.b16 %v735
        %v1037 = vunpack.c.h.b16 %v735
        %v1038 = vunpack.c.l.b16 %v736
        %v1039 = vunpack.c.h.b16 %v736
        %v1040 = vunpack.c.l.b16 %v737
        %v1041 = vunpack.c.h.b16 %v737
        %v1042 = vunpack.c.l.b16 %v738
        %v1043 = vunpack.c.h.b16 %v738
        %v1044 = vunpack.c.l.b16 %v739
        %v1045 = vunpack.c.h.b16 %v739
        %v1046 = vunpack.c.l.b16 %v740
        %v1047 = vunpack.c.h.b16 %v740
        %v1048 = vunpack.c.l.b16 %v741
        %v1049 = vunpack.c.h.b16 %v741
        %v1050 = vunpack.c.l.b16 %v742
        %v1051 = vunpack.c.h.b16 %v742
        %v1052 = vunpack.c.l.b16 %v743
        %v1053 = vunpack.c.h.b16 %v743
        %v1054 = vunpack.c.l.b16 %v744
        %v1055 = vunpack.c.h.b16 %v744
        %v1056 = vunpack.c.l.b16 %v745
        %v1057 = vunpack.c.h.b16 %v745
        %v1058 = vunpack.c.l.b16 %v746
        %v1059 = vunpack.c.h.b16 %v746
        %v1060 = vunpack.c.l.b16 %v747
        %v1061 = vunpack.c.h.b16 %v747
        %v1062 = vunpack.c.l.b16 %v748
        %v1063 = vunpack.c.h.b16 %v748
        %v1064 = vunpack.c.l.b16 %v749
        %v1065 = vunpack.c.h.b16 %v749
        %v1066 = vunpack.c.l.b16 %v750
        %v1067 = vunpack.c.h.b16 %v750
        %v1068 = vunpack.c.l.b16 %v751
        %v1069 = vunpack.c.h.b16 %v751
        %v1070 = vunpack.c.l.b16 %v752
        %v1071 = vunpack.c.h.b16 %v752
        %v1072 = vunpack.c.l.b16 %v753
        %v1073 = vunpack.c.h.b16 %v753
        %v1074 = vunpack.c.l.b16 %v754
        %v1075 = vunpack.c.h.b16 %v754
        %v1076 = vunpack.c.l.b16 %v755
        %v1077 = vunpack.c.h.b16 %v755
        %v1078 = vunpack.c.l.b16 %v756
        %v1079 = vunpack.c.h.b16 %v756
        %v1080 = vunpack.c.l.b16 %v757
        %v1081 = vunpack.c.h.b16 %v757
        %v1082 = vunpack.c.l.b16 %v758
        %v1083 = vunpack.c.h.b16 %v758
        %v1084 = vpack.c.b16 %v1024, %v1020
        %v1085 = vpack.c.b16 %v1025, %v1021
        %v1086 = vpack.c.b16 %v1026, %v1022
        %v1087 = vpack.c.b16 %v1027, %v1023
        %v1088 = vpack.c.b16 %v1032, %v1028
        %v1089 = vpack.c.b16 %v1033, %v1029
        %v1090 = vpack.c.b16 %v1034, %v1030
        %v1091 = vpack.c.b16 %v1035, %v1031
        %v1092 = vpack.c.b16 %v1040, %v1036
        %v1093 = vpack.c.b16 %v1041, %v1037
        %v1094 = vpack.c.b16 %v1042, %v1038
        %v1095 = vpack.c.b16 %v1043, %v1039
        %v1096 = vpack.c.b16 %v1048, %v1044
        %v1097 = vpack.c.b16 %v1049, %v1045
        %v1098 = vpack.c.b16 %v1050, %v1046
        %v1099 = vpack.c.b16 %v1051, %v1047
        %v1100 = vpack.c.b16 %v1056, %v1052
        %v1101 = vpack.c.b16 %v1057, %v1053
        %v1102 = vpack.c.b16 %v1058, %v1054
        %v1103 = vpack.c.b16 %v1059, %v1055
        %v1104 = vpack.c.b16 %v1064, %v1060
        %v1105 = vpack.c.b16 %v1065, %v1061
        %v1106 = vpack.c.b16 %v1066, %v1062
        %v1107 = vpack.c.b16 %v1067, %v1063
        %v1108 = vpack.c.b16 %v1072, %v1068
        %v1109 = vpack.c.b16 %v1073, %v1069
        %v1110 = vpack.c.b16 %v1074, %v1070
        %v1111 = vpack.c.b16 %v1075, %v1071
        %v1112 = vpack.c.b16 %v1080, %v1076
        %v1113 = vpack.c.b16 %v1081, %v1077
        %v1114 = vpack.c.b16 %v1082, %v1078
        %v1115 = vpack.c.b16 %v1083, %v1079
        %1148 = vmatprep.subr.bf16.mxu0 %v1113
        %1149 = vmatpush1.bf16.msra.mxu0 %v1112
        %1150 = vmatprep.subr.bf16.mxu0 %v1109
        %1151 = vmatpush1.bf16.msra.mxu0 %v1108
        %1152 = vmatprep.subr.bf16.mxu0 %v1105
        %1153 = vmatpush1.bf16.msra.mxu0 %v1104
        %1154 = vmatprep.subr.bf16.mxu0 %v1101
        %1155 = vmatpush1.bf16.msra.mxu0 %v1100
        %1156 = vmatprep.subr.bf16.mxu0 %v1097
        %1157 = vmatpush1.bf16.msra.mxu0 %v1096
        %1158 = vmatprep.subr.bf16.mxu0 %v1093
        %1159 = vmatpush1.bf16.msra.mxu0 %v1092
        %1160 = vmatprep.subr.bf16.mxu0 %v1089
        %1161 = vmatpush1.bf16.msra.mxu0 %v1088
        %1162 = vmatprep.subr.bf16.mxu0 %v1085
        %1163 = vmatpush1.bf16.msra.mxu0 %v1084
        %1164 = vmatprep.subr.bf16.mxu0 0
        %1165 = vmatpush2.bf16.msra.mxu0 0
        %1166 = vmatprep.subr.bf16.mxu0 0
        %1167 = vmatpush2.bf16.msra.mxu0 0
        %1168 = vmatprep.subr.bf16.mxu0 0
        %1169 = vmatpush2.bf16.msra.mxu0 0
        %1170 = vmatprep.subr.bf16.mxu0 0
        %1171 = vmatpush2.bf16.msra.mxu0 0
        %1172 = vmatprep.subr.bf16.mxu0 0
        %1173 = vmatpush2.bf16.msra.mxu0 0
        %1174 = vmatprep.subr.bf16.mxu0 0
        %1175 = vmatpush2.bf16.msra.mxu0 0
        %1176 = vmatprep.subr.bf16.mxu0 0
        %1177 = vmatpush2.bf16.msra.mxu0 0
        %1178 = vmatprep.subr.bf16.mxu0 0
        %1179 = vmatpush2.bf16.msra.mxu0 0
        %1180 = vmatprep.mubr.bf16.mxu0 0
        %1181 = vmatmul.mubr.bf16.gmra.mxu0 %v966
        %v1182 = vpop.f32.mrf.mxu0
        %v1183 = vadd.f32 %v971, %v1182
        %v1184 = vpop.f32.mrf.mxu0
        %v1185 = vadd.f32 %v975, %v1184
        %v1186 = vpop.f32.mrf.mxu0
        %v1187 = vpop.f32.mrf.mxu0
        %1188 = vdwg.mxu0
        %1189 = vmatprep.subr.bf16.mxu0 %v1115
        %1190 = vmatpush1.bf16.msra.mxu0 %v1114
        %1191 = vmatprep.subr.bf16.mxu0 %v1111
        %1192 = vmatpush1.bf16.msra.mxu0 %v1110
        %1193 = vmatprep.subr.bf16.mxu0 %v1107
        %1194 = vmatpush1.bf16.msra.mxu0 %v1106
        %1195 = vmatprep.subr.bf16.mxu0 %v1103
        %1196 = vmatpush1.bf16.msra.mxu0 %v1102
        %1197 = vmatprep.subr.bf16.mxu0 %v1099
        %1198 = vmatpush1.bf16.msra.mxu0 %v1098
        %1199 = vmatprep.subr.bf16.mxu0 %v1095
        %1200 = vmatpush1.bf16.msra.mxu0 %v1094
        %1201 = vmatprep.subr.bf16.mxu0 %v1091
        %1202 = vmatpush1.bf16.msra.mxu0 %v1090
        %1203 = vmatprep.subr.bf16.mxu0 %v1087
        %1204 = vmatpush1.bf16.msra.mxu0 %v1086
        %1205 = vmatprep.subr.bf16.mxu0 0
        %1206 = vmatpush2.bf16.msra.mxu0 0
        %1207 = vmatprep.subr.bf16.mxu0 0
        %1208 = vmatpush2.bf16.msra.mxu0 0
        %1209 = vmatprep.subr.bf16.mxu0 0
        %1210 = vmatpush2.bf16.msra.mxu0 0
        %1211 = vmatprep.subr.bf16.mxu0 0
        %1212 = vmatpush2.bf16.msra.mxu0 0
        %1213 = vmatprep.subr.bf16.mxu0 0
        %1214 = vmatpush2.bf16.msra.mxu0 0
        %1215 = vmatprep.subr.bf16.mxu0 0
        %1216 = vmatpush2.bf16.msra.mxu0 0
        %1217 = vmatprep.subr.bf16.mxu0 0
        %1218 = vmatpush2.bf16.msra.mxu0 0
        %1219 = vmatprep.subr.bf16.mxu0 0
        %1220 = vmatpush2.bf16.msra.mxu0 0
        %1221 = vmatprep.mubr.bf16.mxu0 0
        %1222 = vmatmul.mubr.bf16.gmra.mxu0 %v966
        %v1223 = vpop.f32.mrf.mxu0
        %v1224 = vadd.f32 %v979, %v1223
        %v1225 = vpop.f32.mrf.mxu0
        %v1226 = vadd.f32 %v983, %v1225
        %v1227 = vpop.f32.mrf.mxu0
        %v1228 = vpop.f32.mrf.mxu0
        %1229 = vdwg.mxu0
        %v1230 = vmul.f32 %v1183, 0.5
        %v1231 = vmul.f32 %v1185, 0.5
        %v1232 = vmul.f32 %v1224, 0.5
        %v1233 = vmul.f32 %v1226, 0.5
        %v1234 = vmul.f32 %v1183, 0.044715
        %v1235 = vmul.f32 %v1185, 0.044715
        %v1236 = vmul.f32 %v1224, 0.044715
        %v1237 = vmul.f32 %v1226, 0.044715
        %v1238 = vmul.f32 %v1234, %v1183
        %v1239 = vmul.f32 %v1235, %v1185
        %v1240 = vmul.f32 %v1236, %v1224
        %v1241 = vmul.f32 %v1237, %v1226
        %v1242 = vmul.f32 %v1238, %v1183
        %v1243 = vmul.f32 %v1239, %v1185
        %v1244 = vmul.f32 %v1240, %v1224
        %v1245 = vmul.f32 %v1241, %v1226
        %v1246 = vadd.f32 %v1183, %v1242
        %v1247 = vadd.f32 %v1185, %v1243
        %v1248 = vadd.f32 %v1224, %v1244
        %v1249 = vadd.f32 %v1226, %v1245
        %v1250 = vmul.f32 %v1246, 0.7978846
        %v1251 = vmul.f32 %v1247, 0.7978846
        %v1252 = vmul.f32 %v1248, 0.7978846
        %v1253 = vmul.f32 %v1249, 0.7978846
        %v1254 = vtanh.pop %v1250
        %v1255 = vtanh.pop %v1251
        %v1256 = vtanh.pop %v1252
        %v1257 = vtanh.pop %v1253
        %v1258 = vadd.f32 %v1254, 1.0
        %v1259 = vadd.f32 %v1255, 1.0
        %v1260 = vadd.f32 %v1256, 1.0
        %v1261 = vadd.f32 %v1257, 1.0
        %v1262 = vmul.f32 %v1230, %v1258
        %v1263 = vmul.f32 %v1231, %v1259
        %v1264 = vmul.f32 %v1232, %v1260
        %v1265 = vmul.f32 %v1233, %v1261
        %v1266 = vpack.c.bf16 %v1262, %v1262
        %v1267 = vpack.c.bf16 %v1263, %v1263
        %v1268 = vpack.c.bf16 %v1264, %v1264
        %v1269 = vpack.c.bf16 %v1265, %v1265
        %v1270 = vlaneseq
        %v1271 = vshrl.u32 %v1270, 7
        %v1272 = vsub.s32 0, %v1271
        %v1273 = vrot.slane %v824, %v1272
        %v1338 = vunpack.c.l.b16 %v760
        %v1339 = vunpack.c.l.b16 %v761
        %v1340 = vunpack.c.l.b16 %v762
        %v1341 = vunpack.c.l.b16 %v763
        %v1342 = vunpack.c.l.b16 %v764
        %v1343 = vunpack.c.l.b16 %v765
        %v1344 = vunpack.c.l.b16 %v766
        %v1345 = vunpack.c.l.b16 %v767
        %v1346 = vunpack.c.l.b16 %v768
        %v1347 = vunpack.c.l.b16 %v769
        %v1348 = vunpack.c.l.b16 %v770
        %v1349 = vunpack.c.l.b16 %v771
        %v1350 = vunpack.c.l.b16 %v772
        %v1351 = vunpack.c.l.b16 %v773
        %v1352 = vunpack.c.l.b16 %v774
        %v1353 = vunpack.c.l.b16 %v775
        %v1354 = vunpack.c.l.b16 %v776
        %v1355 = vunpack.c.l.b16 %v777
        %v1356 = vunpack.c.l.b16 %v778
        %v1357 = vunpack.c.l.b16 %v779
        %v1358 = vunpack.c.l.b16 %v780
        %v1359 = vunpack.c.l.b16 %v781
        %v1360 = vunpack.c.l.b16 %v782
        %v1361 = vunpack.c.l.b16 %v783
        %v1362 = vunpack.c.l.b16 %v784
        %v1363 = vunpack.c.l.b16 %v785
        %v1364 = vunpack.c.l.b16 %v786
        %v1365 = vunpack.c.l.b16 %v787
        %v1366 = vunpack.c.l.b16 %v788
        %v1367 = vunpack.c.l.b16 %v789
        %v1368 = vunpack.c.l.b16 %v790
        %v1369 = vunpack.c.l.b16 %v791
        %v1370 = vunpack.c.l.b16 %v792
        %v1371 = vunpack.c.l.b16 %v793
        %v1372 = vunpack.c.l.b16 %v794
        %v1373 = vunpack.c.l.b16 %v795
        %v1374 = vunpack.c.l.b16 %v796
        %v1375 = vunpack.c.l.b16 %v797
        %v1376 = vunpack.c.l.b16 %v798
        %v1377 = vunpack.c.l.b16 %v799
        %v1378 = vunpack.c.l.b16 %v800
        %v1379 = vunpack.c.l.b16 %v801
        %v1380 = vunpack.c.l.b16 %v802
        %v1381 = vunpack.c.l.b16 %v803
        %v1382 = vunpack.c.l.b16 %v804
        %v1383 = vunpack.c.l.b16 %v805
        %v1384 = vunpack.c.l.b16 %v806
        %v1385 = vunpack.c.l.b16 %v807
        %v1386 = vunpack.c.l.b16 %v808
        %v1387 = vunpack.c.l.b16 %v809
        %v1388 = vunpack.c.l.b16 %v810
        %v1389 = vunpack.c.l.b16 %v811
        %v1390 = vunpack.c.l.b16 %v812
        %v1391 = vunpack.c.l.b16 %v813
        %v1392 = vunpack.c.l.b16 %v814
        %v1393 = vunpack.c.l.b16 %v815
        %v1394 = vunpack.c.l.b16 %v816
        %v1395 = vunpack.c.l.b16 %v817
        %v1396 = vunpack.c.l.b16 %v818
        %v1397 = vunpack.c.l.b16 %v819
        %v1398 = vunpack.c.l.b16 %v820
        %v1399 = vunpack.c.l.b16 %v821
        %v1400 = vunpack.c.l.b16 %v822
        %v1401 = vunpack.c.l.b16 %v823
        %v1402 = vpack.c.b16 %v1339, %v1338
        %v1403 = vpack.c.b16 %v1341, %v1340
        %v1404 = vpack.c.b16 %v1343, %v1342
        %v1405 = vpack.c.b16 %v1345, %v1344
        %v1406 = vpack.c.b16 %v1347, %v1346
        %v1407 = vpack.c.b16 %v1349, %v1348
        %v1408 = vpack.c.b16 %v1351, %v1350
        %v1409 = vpack.c.b16 %v1353, %v1352
        %v1410 = vpack.c.b16 %v1355, %v1354
        %v1411 = vpack.c.b16 %v1357, %v1356
        %v1412 = vpack.c.b16 %v1359, %v1358
        %v1413 = vpack.c.b16 %v1361, %v1360
        %v1414 = vpack.c.b16 %v1363, %v1362
        %v1415 = vpack.c.b16 %v1365, %v1364
        %v1416 = vpack.c.b16 %v1367, %v1366
        %v1417 = vpack.c.b16 %v1369, %v1368
        %v1418 = vpack.c.b16 %v1371, %v1370
        %v1419 = vpack.c.b16 %v1373, %v1372
        %v1420 = vpack.c.b16 %v1375, %v1374
        %v1421 = vpack.c.b16 %v1377, %v1376
        %v1422 = vpack.c.b16 %v1379, %v1378
        %v1423 = vpack.c.b16 %v1381, %v1380
        %v1424 = vpack.c.b16 %v1383, %v1382
        %v1425 = vpack.c.b16 %v1385, %v1384
        %v1426 = vpack.c.b16 %v1387, %v1386
        %v1427 = vpack.c.b16 %v1389, %v1388
        %v1428 = vpack.c.b16 %v1391, %v1390
        %v1429 = vpack.c.b16 %v1393, %v1392
        %v1430 = vpack.c.b16 %v1395, %v1394
        %v1431 = vpack.c.b16 %v1397, %v1396
        %v1432 = vpack.c.b16 %v1399, %v1398
        %v1433 = vpack.c.b16 %v1401, %v1400
        %1466 = vmatprep.subr.bf16.mxu0 0
        %1467 = vmatpush1.bf16.msra.mxu0 %v1409
        %1468 = vmatprep.subr.bf16.mxu0 0
        %1469 = vmatpush1.bf16.msra.mxu0 %v1408
        %1470 = vmatprep.subr.bf16.mxu0 0
        %1471 = vmatpush1.bf16.msra.mxu0 %v1407
        %1472 = vmatprep.subr.bf16.mxu0 0
        %1473 = vmatpush1.bf16.msra.mxu0 %v1406
        %1474 = vmatprep.subr.bf16.mxu0 0
        %1475 = vmatpush1.bf16.msra.mxu0 %v1405
        %1476 = vmatprep.subr.bf16.mxu0 0
        %1477 = vmatpush1.bf16.msra.mxu0 %v1404
        %1478 = vmatprep.subr.bf16.mxu0 0
        %1479 = vmatpush1.bf16.msra.mxu0 %v1403
        %1480 = vmatprep.subr.bf16.mxu0 0
        %1481 = vmatpush1.bf16.msra.mxu0 %v1402
        %1482 = vmatprep.subr.bf16.mxu0 0
        %1483 = vmatpush2.bf16.msra.mxu0 %v1417
        %1484 = vmatprep.subr.bf16.mxu0 0
        %1485 = vmatpush2.bf16.msra.mxu0 %v1416
        %1486 = vmatprep.subr.bf16.mxu0 0
        %1487 = vmatpush2.bf16.msra.mxu0 %v1415
        %1488 = vmatprep.subr.bf16.mxu0 0
        %1489 = vmatpush2.bf16.msra.mxu0 %v1414
        %1490 = vmatprep.subr.bf16.mxu0 0
        %1491 = vmatpush2.bf16.msra.mxu0 %v1413
        %1492 = vmatprep.subr.bf16.mxu0 0
        %1493 = vmatpush2.bf16.msra.mxu0 %v1412
        %1494 = vmatprep.subr.bf16.mxu0 0
        %1495 = vmatpush2.bf16.msra.mxu0 %v1411
        %1496 = vmatprep.subr.bf16.mxu0 0
        %1497 = vmatpush2.bf16.msra.mxu0 %v1410
        %1498 = vmatprep.mubr.bf16.mxu0 %v1267
        %1499 = vmatmul.mubr.bf16.gmra.mxu0 %v1266
        %v1500 = vpop.f32.mrf.mxu0
        %v1501 = vadd.f32 %v1273, %v1500
        %v1502 = vpop.f32.mrf.mxu0
        %v1503 = vpop.f32.mrf.mxu0
        %v1504 = vpop.f32.mrf.mxu0
        %1505 = vdwg.mxu0
        %1506 = vmatprep.subr.bf16.mxu0 0
        %1507 = vmatpush1.bf16.msra.mxu0 %v1425
        %1508 = vmatprep.subr.bf16.mxu0 0
        %1509 = vmatpush1.bf16.msra.mxu0 %v1424
        %1510 = vmatprep.subr.bf16.mxu0 0
        %1511 = vmatpush1.bf16.msra.mxu0 %v1423
        %1512 = vmatprep.subr.bf16.mxu0 0
        %1513 = vmatpush1.bf16.msra.mxu0 %v1422
        %1514 = vmatprep.subr.bf16.mxu0 0
        %1515 = vmatpush1.bf16.msra.mxu0 %v1421
        %1516 = vmatprep.subr.bf16.mxu0 0
        %1517 = vmatpush1.bf16.msra.mxu0 %v1420
        %1518 = vmatprep.subr.bf16.mxu0 0
        %1519 = vmatpush1.bf16.msra.mxu0 %v1419
        %1520 = vmatprep.subr.bf16.mxu0 0
        %1521 = vmatpush1.bf16.msra.mxu0 %v1418
        %1522 = vmatprep.subr.bf16.mxu0 0
        %1523 = vmatpush2.bf16.msra.mxu0 %v1433
        %1524 = vmatprep.subr.bf16.mxu0 0
        %1525 = vmatpush2.bf16.msra.mxu0 %v1432
        %1526 = vmatprep.subr.bf16.mxu0 0
        %1527 = vmatpush2.bf16.msra.mxu0 %v1431
        %1528 = vmatprep.subr.bf16.mxu0 0
        %1529 = vmatpush2.bf16.msra.mxu0 %v1430
        %1530 = vmatprep.subr.bf16.mxu0 0
        %1531 = vmatpush2.bf16.msra.mxu0 %v1429
        %1532 = vmatprep.subr.bf16.mxu0 0
        %1533 = vmatpush2.bf16.msra.mxu0 %v1428
        %1534 = vmatprep.subr.bf16.mxu0 0
        %1535 = vmatpush2.bf16.msra.mxu0 %v1427
        %1536 = vmatprep.subr.bf16.mxu0 0
        %1537 = vmatpush2.bf16.msra.mxu0 %v1426
        %1538 = vmatprep.mubr.bf16.mxu0 %v1269
        %1539 = vmatmul.mubr.bf16.gmra.mxu0 %v1268
        %v1540 = vpop.f32.mrf.mxu0
        %v1541 = vadd.f32 %v1501, %v1540
        %v1542 = vpop.f32.mrf.mxu0
        %v1543 = vpop.f32.mrf.mxu0
        %v1544 = vpop.f32.mrf.mxu0
        %1545 = vdwg.mxu0
        %v1546 = vadd.f32 %v942, %v1541
        %v1547 = vld [vmem:[%s2 + $0x1] sm:$0x1]
        %v1548 = vld [vmem:[%s3 + $0x1] sm:$0x1]
        %s1549 = scalar_lea.vmem [#allocation5], 64
        %v1550 = vld [vmem:[%s1549] sm:$0xf]
        %v1551 = vld [vmem:[%s1549 + $0x4] sm:$0xf]
        %v1552 = vld [vmem:[%s1549 + $0x8] sm:$0xf]
        %v1553 = vld [vmem:[%s1549 + $0xc] sm:$0xf]
        %v1554 = vld [vmem:[%s1549 + $0x10] sm:$0xf]
        %v1555 = vld [vmem:[%s1549 + $0x14] sm:$0xf]
        %v1556 = vld [vmem:[%s1549 + $0x18] sm:$0xf]
        %v1557 = vld [vmem:[%s1549 + $0x1c] sm:$0xf]
        %v1558 = vld [vmem:[%s1549 + $0x20] sm:$0xf]
        %v1559 = vld [vmem:[%s1549 + $0x24] sm:$0xf]
        %v1560 = vld [vmem:[%s1549 + $0x28] sm:$0xf]
        %v1561 = vld [vmem:[%s1549 + $0x2c] sm:$0xf]
        %v1562 = vld [vmem:[%s1549 + $0x30] sm:$0xf]
        %v1563 = vld [vmem:[%s1549 + $0x34] sm:$0xf]
        %v1564 = vld [vmem:[%s1549 + $0x38] sm:$0xf]
        %v1565 = vld [vmem:[%s1549 + $0x3c] sm:$0xf]
        %v1566 = vld [vmem:[%s5 + $0x1] sm:$0x1]
        %v1567 = vld [vmem:[%s6 + $0x1] sm:$0x1]
        %v1568 = vld [vmem:[%s7 + $0x1] sm:$0x1]
        %s1569 = scalar_lea.vmem [#allocation7], 256
        %v1570 = vld [vmem:[%s1569] sm:$0xff]
        %v1571 = vld [vmem:[%s1569 + $0x8] sm:$0xff]
        %v1572 = vld [vmem:[%s1569 + $0x10] sm:$0xff]
        %v1573 = vld [vmem:[%s1569 + $0x18] sm:$0xff]
        %v1574 = vld [vmem:[%s1569 + $0x20] sm:$0xff]
        %v1575 = vld [vmem:[%s1569 + $0x28] sm:$0xff]
        %v1576 = vld [vmem:[%s1569 + $0x30] sm:$0xff]
        %v1577 = vld [vmem:[%s1569 + $0x38] sm:$0xff]
        %v1578 = vld [vmem:[%s1569 + $0x40] sm:$0xff]
        %v1579 = vld [vmem:[%s1569 + $0x48] sm:$0xff]
        %v1580 = vld [vmem:[%s1569 + $0x50] sm:$0xff]
        %v1581 = vld [vmem:[%s1569 + $0x58] sm:$0xff]
        %v1582 = vld [vmem:[%s1569 + $0x60] sm:$0xff]
        %v1583 = vld [vmem:[%s1569 + $0x68] sm:$0xff]
        %v1584 = vld [vmem:[%s1569 + $0x70] sm:$0xff]
        %v1585 = vld [vmem:[%s1569 + $0x78] sm:$0xff]
        %v1586 = vld [vmem:[%s1569 + $0x80] sm:$0xff]
        %v1587 = vld [vmem:[%s1569 + $0x88] sm:$0xff]
        %v1588 = vld [vmem:[%s1569 + $0x90] sm:$0xff]
        %v1589 = vld [vmem:[%s1569 + $0x98] sm:$0xff]
        %v1590 = vld [vmem:[%s1569 + $0xa0] sm:$0xff]
        %v1591 = vld [vmem:[%s1569 + $0xa8] sm:$0xff]
        %v1592 = vld [vmem:[%s1569 + $0xb0] sm:$0xff]
        %v1593 = vld [vmem:[%s1569 + $0xb8] sm:$0xff]
        %v1594 = vld [vmem:[%s1569 + $0xc0] sm:$0xff]
        %v1595 = vld [vmem:[%s1569 + $0xc8] sm:$0xff]
        %v1596 = vld [vmem:[%s1569 + $0xd0] sm:$0xff]
        %v1597 = vld [vmem:[%s1569 + $0xd8] sm:$0xff]
        %v1598 = vld [vmem:[%s1569 + $0xe0] sm:$0xff]
        %v1599 = vld [vmem:[%s1569 + $0xe8] sm:$0xff]
        %v1600 = vld [vmem:[%s1569 + $0xf0] sm:$0xff]
        %v1601 = vld [vmem:[%s1569 + $0xf8] sm:$0xff]
        %s1602 = scalar_lea.vmem %s9, 1
        %v1603 = vld [vmem:[%s1602] ss:$2 sm:$0xf]
        %s1604 = scalar_lea.vmem [#allocation8], 256
        %v1605 = vld [vmem:[%s1604] sm:$0xf]
        %v1606 = vld [vmem:[%s1604 + $0x4] sm:$0xf]
        %v1607 = vld [vmem:[%s1604 + $0x8] sm:$0xf]
        %v1608 = vld [vmem:[%s1604 + $0xc] sm:$0xf]
        %v1609 = vld [vmem:[%s1604 + $0x10] sm:$0xf]
        %v1610 = vld [vmem:[%s1604 + $0x14] sm:$0xf]
        %v1611 = vld [vmem:[%s1604 + $0x18] sm:$0xf]
        %v1612 = vld [vmem:[%s1604 + $0x1c] sm:$0xf]
        %v1613 = vld [vmem:[%s1604 + $0x20] sm:$0xf]
        %v1614 = vld [vmem:[%s1604 + $0x24] sm:$0xf]
        %v1615 = vld [vmem:[%s1604 + $0x28] sm:$0xf]
        %v1616 = vld [vmem:[%s1604 + $0x2c] sm:$0xf]
        %v1617 = vld [vmem:[%s1604 + $0x30] sm:$0xf]
        %v1618 = vld [vmem:[%s1604 + $0x34] sm:$0xf]
        %v1619 = vld [vmem:[%s1604 + $0x38] sm:$0xf]
        %v1620 = vld [vmem:[%s1604 + $0x3c] sm:$0xf]
        %v1621 = vld [vmem:[%s1604 + $0x40] sm:$0xf]
        %v1622 = vld [vmem:[%s1604 + $0x44] sm:$0xf]
        %v1623 = vld [vmem:[%s1604 + $0x48] sm:$0xf]
        %v1624 = vld [vmem:[%s1604 + $0x4c] sm:$0xf]
        %v1625 = vld [vmem:[%s1604 + $0x50] sm:$0xf]
        %v1626 = vld [vmem:[%s1604 + $0x54] sm:$0xf]
        %v1627 = vld [vmem:[%s1604 + $0x58] sm:$0xf]
        %v1628 = vld [vmem:[%s1604 + $0x5c] sm:$0xf]
        %v1629 = vld [vmem:[%s1604 + $0x60] sm:$0xf]
        %v1630 = vld [vmem:[%s1604 + $0x64] sm:$0xf]
        %v1631 = vld [vmem:[%s1604 + $0x68] sm:$0xf]
        %v1632 = vld [vmem:[%s1604 + $0x6c] sm:$0xf]
        %v1633 = vld [vmem:[%s1604 + $0x70] sm:$0xf]
        %v1634 = vld [vmem:[%s1604 + $0x74] sm:$0xf]
        %v1635 = vld [vmem:[%s1604 + $0x78] sm:$0xf]
        %v1636 = vld [vmem:[%s1604 + $0x7c] sm:$0xf]
        %v1637 = vld [vmem:[%s1604 + $0x80] sm:$0xf]
        %v1638 = vld [vmem:[%s1604 + $0x84] sm:$0xf]
        %v1639 = vld [vmem:[%s1604 + $0x88] sm:$0xf]
        %v1640 = vld [vmem:[%s1604 + $0x8c] sm:$0xf]
        %v1641 = vld [vmem:[%s1604 + $0x90] sm:$0xf]
        %v1642 = vld [vmem:[%s1604 + $0x94] sm:$0xf]
        %v1643 = vld [vmem:[%s1604 + $0x98] sm:$0xf]
        %v1644 = vld [vmem:[%s1604 + $0x9c] sm:$0xf]
        %v1645 = vld [vmem:[%s1604 + $0xa0] sm:$0xf]
        %v1646 = vld [vmem:[%s1604 + $0xa4] sm:$0xf]
        %v1647 = vld [vmem:[%s1604 + $0xa8] sm:$0xf]
        %v1648 = vld [vmem:[%s1604 + $0xac] sm:$0xf]
        %v1649 = vld [vmem:[%s1604 + $0xb0] sm:$0xf]
        %v1650 = vld [vmem:[%s1604 + $0xb4] sm:$0xf]
        %v1651 = vld [vmem:[%s1604 + $0xb8] sm:$0xf]
        %v1652 = vld [vmem:[%s1604 + $0xbc] sm:$0xf]
        %v1653 = vld [vmem:[%s1604 + $0xc0] sm:$0xf]
        %v1654 = vld [vmem:[%s1604 + $0xc4] sm:$0xf]
        %v1655 = vld [vmem:[%s1604 + $0xc8] sm:$0xf]
        %v1656 = vld [vmem:[%s1604 + $0xcc] sm:$0xf]
        %v1657 = vld [vmem:[%s1604 + $0xd0] sm:$0xf]
        %v1658 = vld [vmem:[%s1604 + $0xd4] sm:$0xf]
        %v1659 = vld [vmem:[%s1604 + $0xd8] sm:$0xf]
        %v1660 = vld [vmem:[%s1604 + $0xdc] sm:$0xf]
        %v1661 = vld [vmem:[%s1604 + $0xe0] sm:$0xf]
        %v1662 = vld [vmem:[%s1604 + $0xe4] sm:$0xf]
        %v1663 = vld [vmem:[%s1604 + $0xe8] sm:$0xf]
        %v1664 = vld [vmem:[%s1604 + $0xec] sm:$0xf]
        %v1665 = vld [vmem:[%s1604 + $0xf0] sm:$0xf]
        %v1666 = vld [vmem:[%s1604 + $0xf4] sm:$0xf]
        %v1667 = vld [vmem:[%s1604 + $0xf8] sm:$0xf]
        %v1668 = vld [vmem:[%s1604 + $0xfc] sm:$0xf]
        %v1669 = vld [vmem:[%s11 + $0x1] sm:$0x1]
        %1670 = vadd.xlane.f32.xlu0 %v1546
        %v1671 = vpop.xlane.xlu0 %1670
        %v1672 = vmul.f32 %v1671, %v827
        %v1673 = vmul.f32 %v1546, %v1546
        %1674 = vadd.xlane.f32.xlu0 %v1673
        %v1675 = vpop.xlane.xlu0 %1674
        %v1676 = vmul.f32 %v1675, %v827
        %v1677 = vmul.f32 %v1672, %v1672
        %v1678 = vsub.f32 %v1676, %v1677
        %v1679 = vsub.f32 %v1546, %v1672
        %v1680 = vadd.f32 %v1678, 1e-05
        %v1681 = vrsqrt.pop %v1680
        %v1682 = vmul.f32 %v1679, %v1681
        %v1683 = vlaneseq
        %v1684 = vshrl.u32 %v1683, 7
        %v1685 = vsub.s32 0, %v1684
        %v1686 = vrot.slane %v1547, %v1685
        %v1687 = vmul.f32 %v1682, %v1686
        %v1688 = vlaneseq
        %v1689 = vshrl.u32 %v1688, 7
        %v1690 = vsub.s32 0, %v1689
        %v1691 = vrot.slane %v1548, %v1690
        %v1692 = vadd.f32 %v1687, %v1691
        %v1693 = vpack.c.bf16 %v1692, %v1692
        %v1694 = vlaneseq
        %v1695 = vshrl.u32 %v1694, 7
        %v1696 = vsub.s32 0, %v1695
        %v1697 = vrot.slane %v1566, %v1696
        %v1714 = vunpack.c.l.b16 %v1550
        %v1715 = vunpack.c.l.b16 %v1551
        %v1716 = vunpack.c.l.b16 %v1552
        %v1717 = vunpack.c.l.b16 %v1553
        %v1718 = vunpack.c.l.b16 %v1554
        %v1719 = vunpack.c.l.b16 %v1555
        %v1720 = vunpack.c.l.b16 %v1556
        %v1721 = vunpack.c.l.b16 %v1557
        %v1722 = vunpack.c.l.b16 %v1558
        %v1723 = vunpack.c.l.b16 %v1559
        %v1724 = vunpack.c.l.b16 %v1560
        %v1725 = vunpack.c.l.b16 %v1561
        %v1726 = vunpack.c.l.b16 %v1562
        %v1727 = vunpack.c.l.b16 %v1563
        %v1728 = vunpack.c.l.b16 %v1564
        %v1729 = vunpack.c.l.b16 %v1565
        %v1730 = vpack.c.b16 %v1715, %v1714
        %v1731 = vpack.c.b16 %v1717, %v1716
        %v1732 = vpack.c.b16 %v1719, %v1718
        %v1733 = vpack.c.b16 %v1721, %v1720
        %v1734 = vpack.c.b16 %v1723, %v1722
        %v1735 = vpack.c.b16 %v1725, %v1724
        %v1736 = vpack.c.b16 %v1727, %v1726
        %v1737 = vpack.c.b16 %v1729, %v1728
        %1746 = vmatprep.subr.bf16.mxu0 0
        %1747 = vmatpush1.bf16.msra.mxu0 %v1737
        %1748 = vmatprep.subr.bf16.mxu0 0
        %1749 = vmatpush1.bf16.msra.mxu0 %v1736
        %1750 = vmatprep.subr.bf16.mxu0 0
        %1751 = vmatpush1.bf16.msra.mxu0 %v1735
        %1752 = vmatprep.subr.bf16.mxu0 0
        %1753 = vmatpush1.bf16.msra.mxu0 %v1734
        %1754 = vmatprep.subr.bf16.mxu0 0
        %1755 = vmatpush1.bf16.msra.mxu0 %v1733
        %1756 = vmatprep.subr.bf16.mxu0 0
        %1757 = vmatpush1.bf16.msra.mxu0 %v1732
        %1758 = vmatprep.subr.bf16.mxu0 0
        %1759 = vmatpush1.bf16.msra.mxu0 %v1731
        %1760 = vmatprep.subr.bf16.mxu0 0
        %1761 = vmatpush1.bf16.msra.mxu0 %v1730
        %1762 = vmatprep.subr.bf16.mxu0 0
        %1763 = vmatpush2.bf16.msra.mxu0 0
        %1764 = vmatprep.subr.bf16.mxu0 0
        %1765 = vmatpush2.bf16.msra.mxu0 0
        %1766 = vmatprep.subr.bf16.mxu0 0
        %1767 = vmatpush2.bf16.msra.mxu0 0
        %1768 = vmatprep.subr.bf16.mxu0 0
        %1769 = vmatpush2.bf16.msra.mxu0 0
        %1770 = vmatprep.subr.bf16.mxu0 0
        %1771 = vmatpush2.bf16.msra.mxu0 0
        %1772 = vmatprep.subr.bf16.mxu0 0
        %1773 = vmatpush2.bf16.msra.mxu0 0
        %1774 = vmatprep.subr.bf16.mxu0 0
        %1775 = vmatpush2.bf16.msra.mxu0 0
        %1776 = vmatprep.subr.bf16.mxu0 0
        %1777 = vmatpush2.bf16.msra.mxu0 0
        %1778 = vmatprep.mubr.bf16.mxu0 0
        %1779 = vmatmul.mubr.bf16.gmra.mxu0 %v1693
        %v1780 = vpop.f32.mrf.mxu0
        %v1781 = vadd.f32 %v1697, %v1780
        %v1782 = vpop.f32.mrf.mxu0
        %v1783 = vpop.f32.mrf.mxu0
        %v1784 = vpop.f32.mrf.mxu0
        %1785 = vdwg.mxu0
        %v1786 = vadd.f32 %v1546, %v1781
        %1787 = vadd.xlane.f32.xlu0 %v1786
        %v1788 = vpop.xlane.xlu0 %1787
        %v1789 = vmul.f32 %v1788, %v827
        %v1790 = vmul.f32 %v1786, %v1786
        %1791 = vadd.xlane.f32.xlu0 %v1790
        %v1792 = vpop.xlane.xlu0 %1791
        %v1793 = vmul.f32 %v1792, %v827
        %v1794 = vmul.f32 %v1789, %v1789
        %v1795 = vsub.f32 %v1793, %v1794
        %v1796 = vsub.f32 %v1786, %v1789
        %v1797 = vadd.f32 %v1795, 1e-05
        %v1798 = vrsqrt.pop %v1797
        %v1799 = vmul.f32 %v1796, %v1798
        %v1800 = vlaneseq
        %v1801 = vshrl.u32 %v1800, 7
        %v1802 = vsub.s32 0, %v1801
        %v1803 = vrot.slane %v1567, %v1802
        %v1804 = vmul.f32 %v1799, %v1803
        %v1805 = vlaneseq
        %v1806 = vshrl.u32 %v1805, 7
        %v1807 = vsub.s32 0, %v1806
        %v1808 = vrot.slane %v1568, %v1807
        %v1809 = vadd.f32 %v1804, %v1808
        %v1810 = vpack.c.bf16 %v1809, %v1809
        %v1812 = vlaneseq
        %v1813 = vshrl.u32 %v1812, 7
        %v1814 = vsub.s32 0, %v1813
        %v1815 = vrot.slane %v1603, %v1814
        %v1816 = vlaneseq
        %v1817 = vshrl.u32 %v1816, 7
        %v1818 = vsub.s32 1, %v1817
        %v1819 = vrot.slane %v1603, %v1818
        %v1820 = vlaneseq
        %v1821 = vshrl.u32 %v1820, 7
        %v1822 = vsub.s32 2, %v1821
        %v1823 = vrot.slane %v1603, %v1822
        %v1824 = vlaneseq
        %v1825 = vshrl.u32 %v1824, 7
        %v1826 = vsub.s32 3, %v1825
        %v1827 = vrot.slane %v1603, %v1826
        %v1864 = vunpack.c.l.b16 %v1570
        %v1865 = vunpack.c.h.b16 %v1570
        %v1866 = vunpack.c.l.b16 %v1571
        %v1867 = vunpack.c.h.b16 %v1571
        %v1868 = vunpack.c.l.b16 %v1572
        %v1869 = vunpack.c.h.b16 %v1572
        %v1870 = vunpack.c.l.b16 %v1573
        %v1871 = vunpack.c.h.b16 %v1573
        %v1872 = vunpack.c.l.b16 %v1574
        %v1873 = vunpack.c.h.b16 %v1574
        %v1874 = vunpack.c.l.b16 %v1575
        %v1875 = vunpack.c.h.b16 %v1575
        %v1876 = vunpack.c.l.b16 %v1576
        %v1877 = vunpack.c.h.b16 %v1576
        %v1878 = vunpack.c.l.b16 %v1577
        %v1879 = vunpack.c.h.b16 %v1577
        %v1880 = vunpack.c.l.b16 %v1578
        %v1881 = vunpack.c.h.b16 %v1578
        %v1882 = vunpack.c.l.b16 %v1579
        %v1883 = vunpack.c.h.b16 %v1579
        %v1884 = vunpack.c.l.b16 %v1580
        %v1885 = vunpack.c.h.b16 %v1580
        %v1886 = vunpack.c.l.b16 %v1581
        %v1887 = vunpack.c.h.b16 %v1581
        %v1888 = vunpack.c.l.b16 %v1582
        %v1889 = vunpack.c.h.b16 %v1582
        %v1890 = vunpack.c.l.b16 %v1583
        %v1891 = vunpack.c.h.b16 %v1583
        %v1892 = vunpack.c.l.b16 %v1584
        %v1893 = vunpack.c.h.b16 %v1584
        %v1894 = vunpack.c.l.b16 %v1585
        %v1895 = vunpack.c.h.b16 %v1585
        %v1896 = vunpack.c.l.b16 %v1586
        %v1897 = vunpack.c.h.b16 %v1586
        %v1898 = vunpack.c.l.b16 %v1587
        %v1899 = vunpack.c.h.b16 %v1587
        %v1900 = vunpack.c.l.b16 %v1588
        %v1901 = vunpack.c.h.b16 %v1588
        %v1902 = vunpack.c.l.b16 %v1589
        %v1903 = vunpack.c.h.b16 %v1589
        %v1904 = vunpack.c.l.b16 %v1590
        %v1905 = vunpack.c.h.b16 %v1590
        %v1906 = vunpack.c.l.b16 %v1591
        %v1907 = vunpack.c.h.b16 %v1591
        %v1908 = vunpack.c.l.b16 %v1592
        %v1909 = vunpack.c.h.b16 %v1592
        %v1910 = vunpack.c.l.b16 %v1593
        %v1911 = vunpack.c.h.b16 %v1593
        %v1912 = vunpack.c.l.b16 %v1594
        %v1913 = vunpack.c.h.b16 %v1594
        %v1914 = vunpack.c.l.b16 %v1595
        %v1915 = vunpack.c.h.b16 %v1595
        %v1916 = vunpack.c.l.b16 %v1596
        %v1917 = vunpack.c.h.b16 %v1596
        %v1918 = vunpack.c.l.b16 %v1597
        %v1919 = vunpack.c.h.b16 %v1597
        %v1920 = vunpack.c.l.b16 %v1598
        %v1921 = vunpack.c.h.b16 %v1598
        %v1922 = vunpack.c.l.b16 %v1599
        %v1923 = vunpack.c.h.b16 %v1599
        %v1924 = vunpack.c.l.b16 %v1600
        %v1925 = vunpack.c.h.b16 %v1600
        %v1926 = vunpack.c.l.b16 %v1601
        %v1927 = vunpack.c.h.b16 %v1601
        %v1928 = vpack.c.b16 %v1868, %v1864
        %v1929 = vpack.c.b16 %v1869, %v1865
        %v1930 = vpack.c.b16 %v1870, %v1866
        %v1931 = vpack.c.b16 %v1871, %v1867
        %v1932 = vpack.c.b16 %v1876, %v1872
        %v1933 = vpack.c.b16 %v1877, %v1873
        %v1934 = vpack.c.b16 %v1878, %v1874
        %v1935 = vpack.c.b16 %v1879, %v1875
        %v1936 = vpack.c.b16 %v1884, %v1880
        %v1937 = vpack.c.b16 %v1885, %v1881
        %v1938 = vpack.c.b16 %v1886, %v1882
        %v1939 = vpack.c.b16 %v1887, %v1883
        %v1940 = vpack.c.b16 %v1892, %v1888
        %v1941 = vpack.c.b16 %v1893, %v1889
        %v1942 = vpack.c.b16 %v1894, %v1890
        %v1943 = vpack.c.b16 %v1895, %v1891
        %v1944 = vpack.c.b16 %v1900, %v1896
        %v1945 = vpack.c.b16 %v1901, %v1897
        %v1946 = vpack.c.b16 %v1902, %v1898
        %v1947 = vpack.c.b16 %v1903, %v1899
        %v1948 = vpack.c.b16 %v1908, %v1904
        %v1949 = vpack.c.b16 %v1909, %v1905
        %v1950 = vpack.c.b16 %v1910, %v1906
        %v1951 = vpack.c.b16 %v1911, %v1907
        %v1952 = vpack.c.b16 %v1916, %v1912
        %v1953 = vpack.c.b16 %v1917, %v1913
        %v1954 = vpack.c.b16 %v1918, %v1914
        %v1955 = vpack.c.b16 %v1919, %v1915
        %v1956 = vpack.c.b16 %v1924, %v1920
        %v1957 = vpack.c.b16 %v1925, %v1921
        %v1958 = vpack.c.b16 %v1926, %v1922
        %v1959 = vpack.c.b16 %v1927, %v1923
        %1992 = vmatprep.subr.bf16.mxu0 %v1957
        %1993 = vmatpush1.bf16.msra.mxu0 %v1956
        %1994 = vmatprep.subr.bf16.mxu0 %v1953
        %1995 = vmatpush1.bf16.msra.mxu0 %v1952
        %1996 = vmatprep.subr.bf16.mxu0 %v1949
        %1997 = vmatpush1.bf16.msra.mxu0 %v1948
        %1998 = vmatprep.subr.bf16.mxu0 %v1945
        %1999 = vmatpush1.bf16.msra.mxu0 %v1944
        %2000 = vmatprep.subr.bf16.mxu0 %v1941
        %2001 = vmatpush1.bf16.msra.mxu0 %v1940
        %2002 = vmatprep.subr.bf16.mxu0 %v1937
        %2003 = vmatpush1.bf16.msra.mxu0 %v1936
        %2004 = vmatprep.subr.bf16.mxu0 %v1933
        %2005 = vmatpush1.bf16.msra.mxu0 %v1932
        %2006 = vmatprep.subr.bf16.mxu0 %v1929
        %2007 = vmatpush1.bf16.msra.mxu0 %v1928
        %2008 = vmatprep.subr.bf16.mxu0 0
        %2009 = vmatpush2.bf16.msra.mxu0 0
        %2010 = vmatprep.subr.bf16.mxu0 0
        %2011 = vmatpush2.bf16.msra.mxu0 0
        %2012 = vmatprep.subr.bf16.mxu0 0
        %2013 = vmatpush2.bf16.msra.mxu0 0
        %2014 = vmatprep.subr.bf16.mxu0 0
        %2015 = vmatpush2.bf16.msra.mxu0 0
        %2016 = vmatprep.subr.bf16.mxu0 0
        %2017 = vmatpush2.bf16.msra.mxu0 0
        %2018 = vmatprep.subr.bf16.mxu0 0
        %2019 = vmatpush2.bf16.msra.mxu0 0
        %2020 = vmatprep.subr.bf16.mxu0 0
        %2021 = vmatpush2.bf16.msra.mxu0 0
        %2022 = vmatprep.subr.bf16.mxu0 0
        %2023 = vmatpush2.bf16.msra.mxu0 0
        %2024 = vmatprep.mubr.bf16.mxu0 0
        %2025 = vmatmul.mubr.bf16.gmra.mxu0 %v1810
        %v2026 = vpop.f32.mrf.mxu0
        %v2027 = vadd.f32 %v1815, %v2026
        %v2028 = vpop.f32.mrf.mxu0
        %v2029 = vadd.f32 %v1819, %v2028
        %v2030 = vpop.f32.mrf.mxu0
        %v2031 = vpop.f32.mrf.mxu0
        %2032 = vdwg.mxu0
        %2033 = vmatprep.subr.bf16.mxu0 %v1959
        %2034 = vmatpush1.bf16.msra.mxu0 %v1958
        %2035 = vmatprep.subr.bf16.mxu0 %v1955
        %2036 = vmatpush1.bf16.msra.mxu0 %v1954
        %2037 = vmatprep.subr.bf16.mxu0 %v1951
        %2038 = vmatpush1.bf16.msra.mxu0 %v1950
        %2039 = vmatprep.subr.bf16.mxu0 %v1947
        %2040 = vmatpush1.bf16.msra.mxu0 %v1946
        %2041 = vmatprep.subr.bf16.mxu0 %v1943
        %2042 = vmatpush1.bf16.msra.mxu0 %v1942
        %2043 = vmatprep.subr.bf16.mxu0 %v1939
        %2044 = vmatpush1.bf16.msra.mxu0 %v1938
        %2045 = vmatprep.subr.bf16.mxu0 %v1935
        %2046 = vmatpush1.bf16.msra.mxu0 %v1934
        %2047 = vmatprep.subr.bf16.mxu0 %v1931
        %2048 = vmatpush1.bf16.msra.mxu0 %v1930
        %2049 = vmatprep.subr.bf16.mxu0 0
        %2050 = vmatpush2.bf16.msra.mxu0 0
        %2051 = vmatprep.subr.bf16.mxu0 0
        %2052 = vmatpush2.bf16.msra.mxu0 0
        %2053 = vmatprep.subr.bf16.mxu0 0
        %2054 = vmatpush2.bf16.msra.mxu0 0
        %2055 = vmatprep.subr.bf16.mxu0 0
        %2056 = vmatpush2.bf16.msra.mxu0 0
        %2057 = vmatprep.subr.bf16.mxu0 0
        %2058 = vmatpush2.bf16.msra.mxu0 0
        %2059 = vmatprep.subr.bf16.mxu0 0
        %2060 = vmatpush2.bf16.msra.mxu0 0
        %2061 = vmatprep.subr.bf16.mxu0 0
        %2062 = vmatpush2.bf16.msra.mxu0 0
        %2063 = vmatprep.subr.bf16.mxu0 0
        %2064 = vmatpush2.bf16.msra.mxu0 0
        %2065 = vmatprep.mubr.bf16.mxu0 0
        %2066 = vmatmul.mubr.bf16.gmra.mxu0 %v1810
        %v2067 = vpop.f32.mrf.mxu0
        %v2068 = vadd.f32 %v1823, %v2067
        %v2069 = vpop.f32.mrf.mxu0
        %v2070 = vadd.f32 %v1827, %v2069
        %v2071 = vpop.f32.mrf.mxu0
        %v2072 = vpop.f32.mrf.mxu0
        %2073 = vdwg.mxu0
        %v2074 = vmul.f32 %v2027, 0.5
        %v2075 = vmul.f32 %v2029, 0.5
        %v2076 = vmul.f32 %v2068, 0.5
        %v2077 = vmul.f32 %v2070, 0.5
        %v2078 = vmul.f32 %v2027, 0.044715
        %v2079 = vmul.f32 %v2029, 0.044715
        %v2080 = vmul.f32 %v2068, 0.044715
        %v2081 = vmul.f32 %v2070, 0.044715
        %v2082 = vmul.f32 %v2078, %v2027
        %v2083 = vmul.f32 %v2079, %v2029
        %v2084 = vmul.f32 %v2080, %v2068
        %v2085 = vmul.f32 %v2081, %v2070
        %v2086 = vmul.f32 %v2082, %v2027
        %v2087 = vmul.f32 %v2083, %v2029
        %v2088 = vmul.f32 %v2084, %v2068
        %v2089 = vmul.f32 %v2085, %v2070
        %v2090 = vadd.f32 %v2027, %v2086
        %v2091 = vadd.f32 %v2029, %v2087
        %v2092 = vadd.f32 %v2068, %v2088
        %v2093 = vadd.f32 %v2070, %v2089
        %v2094 = vmul.f32 %v2090, 0.7978846
        %v2095 = vmul.f32 %v2091, 0.7978846
        %v2096 = vmul.f32 %v2092, 0.7978846
        %v2097 = vmul.f32 %v2093, 0.7978846
        %v2098 = vtanh.pop %v2094
        %v2099 = vtanh.pop %v2095
        %v2100 = vtanh.pop %v2096
        %v2101 = vtanh.pop %v2097
        %v2102 = vadd.f32 %v2098, 1.0
        %v2103 = vadd.f32 %v2099, 1.0
        %v2104 = vadd.f32 %v2100, 1.0
        %v2105 = vadd.f32 %v2101, 1.0
        %v2106 = vmul.f32 %v2074, %v2102
        %v2107 = vmul.f32 %v2075, %v2103
        %v2108 = vmul.f32 %v2076, %v2104
        %v2109 = vmul.f32 %v2077, %v2105
        %v2110 = vpack.c.bf16 %v2106, %v2106
        %v2111 = vpack.c.bf16 %v2107, %v2107
        %v2112 = vpack.c.bf16 %v2108, %v2108
        %v2113 = vpack.c.bf16 %v2109, %v2109
        %v2114 = vlaneseq
        %v2115 = vshrl.u32 %v2114, 7
        %v2116 = vsub.s32 0, %v2115
        %v2117 = vrot.slane %v1669, %v2116
        %v2182 = vunpack.c.l.b16 %v1605
        %v2183 = vunpack.c.l.b16 %v1606
        %v2184 = vunpack.c.l.b16 %v1607
        %v2185 = vunpack.c.l.b16 %v1608
        %v2186 = vunpack.c.l.b16 %v1609
        %v2187 = vunpack.c.l.b16 %v1610
        %v2188 = vunpack.c.l.b16 %v1611
        %v2189 = vunpack.c.l.b16 %v1612
        %v2190 = vunpack.c.l.b16 %v1613
        %v2191 = vunpack.c.l.b16 %v1614
        %v2192 = vunpack.c.l.b16 %v1615
        %v2193 = vunpack.c.l.b16 %v1616
        %v2194 = vunpack.c.l.b16 %v1617
        %v2195 = vunpack.c.l.b16 %v1618
        %v2196 = vunpack.c.l.b16 %v1619
        %v2197 = vunpack.c.l.b16 %v1620
        %v2198 = vunpack.c.l.b16 %v1621
        %v2199 = vunpack.c.l.b16 %v1622
        %v2200 = vunpack.c.l.b16 %v1623
        %v2201 = vunpack.c.l.b16 %v1624
        %v2202 = vunpack.c.l.b16 %v1625
        %v2203 = vunpack.c.l.b16 %v1626
        %v2204 = vunpack.c.l.b16 %v1627
        %v2205 = vunpack.c.l.b16 %v1628
        %v2206 = vunpack.c.l.b16 %v1629
        %v2207 = vunpack.c.l.b16 %v1630
        %v2208 = vunpack.c.l.b16 %v1631
        %v2209 = vunpack.c.l.b16 %v1632
        %v2210 = vunpack.c.l.b16 %v1633
        %v2211 = vunpack.c.l.b16 %v1634
        %v2212 = vunpack.c.l.b16 %v1635
        %v2213 = vunpack.c.l.b16 %v1636
        %v2214 = vunpack.c.l.b16 %v1637
        %v2215 = vunpack.c.l.b16 %v1638
        %v2216 = vunpack.c.l.b16 %v1639
        %v2217 = vunpack.c.l.b16 %v1640
        %v2218 = vunpack.c.l.b16 %v1641
        %v2219 = vunpack.c.l.b16 %v1642
        %v2220 = vunpack.c.l.b16 %v1643
        %v2221 = vunpack.c.l.b16 %v1644
        %v2222 = vunpack.c.l.b16 %v1645
        %v2223 = vunpack.c.l.b16 %v1646
        %v2224 = vunpack.c.l.b16 %v1647
        %v2225 = vunpack.c.l.b16 %v1648
        %v2226 = vunpack.c.l.b16 %v1649
        %v2227 = vunpack.c.l.b16 %v1650
        %v2228 = vunpack.c.l.b16 %v1651
        %v2229 = vunpack.c.l.b16 %v1652
        %v2230 = vunpack.c.l.b16 %v1653
        %v2231 = vunpack.c.l.b16 %v1654
        %v2232 = vunpack.c.l.b16 %v1655
        %v2233 = vunpack.c.l.b16 %v1656
        %v2234 = vunpack.c.l.b16 %v1657
        %v2235 = vunpack.c.l.b16 %v1658
        %v2236 = vunpack.c.l.b16 %v1659
        %v2237 = vunpack.c.l.b16 %v1660
        %v2238 = vunpack.c.l.b16 %v1661
        %v2239 = vunpack.c.l.b16 %v1662
        %v2240 = vunpack.c.l.b16 %v1663
        %v2241 = vunpack.c.l.b16 %v1664
        %v2242 = vunpack.c.l.b16 %v1665
        %v2243 = vunpack.c.l.b16 %v1666
        %v2244 = vunpack.c.l.b16 %v1667
        %v2245 = vunpack.c.l.b16 %v1668
        %v2246 = vpack.c.b16 %v2183, %v2182
        %v2247 = vpack.c.b16 %v2185, %v2184
        %v2248 = vpack.c.b16 %v2187, %v2186
        %v2249 = vpack.c.b16 %v2189, %v2188
        %v2250 = vpack.c.b16 %v2191, %v2190
        %v2251 = vpack.c.b16 %v2193, %v2192
        %v2252 = vpack.c.b16 %v2195, %v2194
        %v2253 = vpack.c.b16 %v2197, %v2196
        %v2254 = vpack.c.b16 %v2199, %v2198
        %v2255 = vpack.c.b16 %v2201, %v2200
        %v2256 = vpack.c.b16 %v2203, %v2202
        %v2257 = vpack.c.b16 %v2205, %v2204
        %v2258 = vpack.c.b16 %v2207, %v2206
        %v2259 = vpack.c.b16 %v2209, %v2208
        %v2260 = vpack.c.b16 %v2211, %v2210
        %v2261 = vpack.c.b16 %v2213, %v2212
        %v2262 = vpack.c.b16 %v2215, %v2214
        %v2263 = vpack.c.b16 %v2217, %v2216
        %v2264 = vpack.c.b16 %v2219, %v2218
        %v2265 = vpack.c.b16 %v2221, %v2220
        %v2266 = vpack.c.b16 %v2223, %v2222
        %v2267 = vpack.c.b16 %v2225, %v2224
        %v2268 = vpack.c.b16 %v2227, %v2226
        %v2269 = vpack.c.b16 %v2229, %v2228
        %v2270 = vpack.c.b16 %v2231, %v2230
        %v2271 = vpack.c.b16 %v2233, %v2232
        %v2272 = vpack.c.b16 %v2235, %v2234
        %v2273 = vpack.c.b16 %v2237, %v2236
        %v2274 = vpack.c.b16 %v2239, %v2238
        %v2275 = vpack.c.b16 %v2241, %v2240
        %v2276 = vpack.c.b16 %v2243, %v2242
        %v2277 = vpack.c.b16 %v2245, %v2244
        %2310 = vmatprep.subr.bf16.mxu0 0
        %2311 = vmatpush1.bf16.msra.mxu0 %v2253
        %2312 = vmatprep.subr.bf16.mxu0 0
        %2313 = vmatpush1.bf16.msra.mxu0 %v2252
        %2314 = vmatprep.subr.bf16.mxu0 0
        %2315 = vmatpush1.bf16.msra.mxu0 %v2251
        %2316 = vmatprep.subr.bf16.mxu0 0
        %2317 = vmatpush1.bf16.msra.mxu0 %v2250
        %2318 = vmatprep.subr.bf16.mxu0 0
        %2319 = vmatpush1.bf16.msra.mxu0 %v2249
        %2320 = vmatprep.subr.bf16.mxu0 0
        %2321 = vmatpush1.bf16.msra.mxu0 %v2248
        %2322 = vmatprep.subr.bf16.mxu0 0
        %2323 = vmatpush1.bf16.msra.mxu0 %v2247
        %2324 = vmatprep.subr.bf16.mxu0 0
        %2325 = vmatpush1.bf16.msra.mxu0 %v2246
        %2326 = vmatprep.subr.bf16.mxu0 0
        %2327 = vmatpush2.bf16.msra.mxu0 %v2261
        %2328 = vmatprep.subr.bf16.mxu0 0
        %2329 = vmatpush2.bf16.msra.mxu0 %v2260
        %2330 = vmatprep.subr.bf16.mxu0 0
        %2331 = vmatpush2.bf16.msra.mxu0 %v2259
        %2332 = vmatprep.subr.bf16.mxu0 0
        %2333 = vmatpush2.bf16.msra.mxu0 %v2258
        %2334 = vmatprep.subr.bf16.mxu0 0
        %2335 = vmatpush2.bf16.msra.mxu0 %v2257
        %2336 = vmatprep.subr.bf16.mxu0 0
        %2337 = vmatpush2.bf16.msra.mxu0 %v2256
        %2338 = vmatprep.subr.bf16.mxu0 0
        %2339 = vmatpush2.bf16.msra.mxu0 %v2255
        %2340 = vmatprep.subr.bf16.mxu0 0
        %2341 = vmatpush2.bf16.msra.mxu0 %v2254
        %2342 = vmatprep.mubr.bf16.mxu0 %v2111
        %2343 = vmatmul.mubr.bf16.gmra.mxu0 %v2110
        %v2344 = vpop.f32.mrf.mxu0
        %v2345 = vadd.f32 %v2117, %v2344
        %v2346 = vpop.f32.mrf.mxu0
        %v2347 = vpop.f32.mrf.mxu0
        %v2348 = vpop.f32.mrf.mxu0
        %2349 = vdwg.mxu0
        %2350 = vmatprep.subr.bf16.mxu0 0
        %2351 = vmatpush1.bf16.msra.mxu0 %v2269
        %2352 = vmatprep.subr.bf16.mxu0 0
        %2353 = vmatpush1.bf16.msra.mxu0 %v2268
        %2354 = vmatprep.subr.bf16.mxu0 0
        %2355 = vmatpush1.bf16.msra.mxu0 %v2267
        %2356 = vmatprep.subr.bf16.mxu0 0
        %2357 = vmatpush1.bf16.msra.mxu0 %v2266
        %2358 = vmatprep.subr.bf16.mxu0 0
        %2359 = vmatpush1.bf16.msra.mxu0 %v2265
        %2360 = vmatprep.subr.bf16.mxu0 0
        %2361 = vmatpush1.bf16.msra.mxu0 %v2264
        %2362 = vmatprep.subr.bf16.mxu0 0
        %2363 = vmatpush1.bf16.msra.mxu0 %v2263
        %2364 = vmatprep.subr.bf16.mxu0 0
        %2365 = vmatpush1.bf16.msra.mxu0 %v2262
        %2366 = vmatprep.subr.bf16.mxu0 0
        %2367 = vmatpush2.bf16.msra.mxu0 %v2277
        %2368 = vmatprep.subr.bf16.mxu0 0
        %2369 = vmatpush2.bf16.msra.mxu0 %v2276
        %2370 = vmatprep.subr.bf16.mxu0 0
        %2371 = vmatpush2.bf16.msra.mxu0 %v2275
        %2372 = vmatprep.subr.bf16.mxu0 0
        %2373 = vmatpush2.bf16.msra.mxu0 %v2274
        %2374 = vmatprep.subr.bf16.mxu0 0
        %2375 = vmatpush2.bf16.msra.mxu0 %v2273
        %2376 = vmatprep.subr.bf16.mxu0 0
        %2377 = vmatpush2.bf16.msra.mxu0 %v2272
        %2378 = vmatprep.subr.bf16.mxu0 0
        %2379 = vmatpush2.bf16.msra.mxu0 %v2271
        %2380 = vmatprep.subr.bf16.mxu0 0
        %2381 = vmatpush2.bf16.msra.mxu0 %v2270
        %2382 = vmatprep.mubr.bf16.mxu0 %v2113
        %2383 = vmatmul.mubr.bf16.gmra.mxu0 %v2112
        %v2384 = vpop.f32.mrf.mxu0
        %v2385 = vadd.f32 %v2345, %v2384
        %v2386 = vpop.f32.mrf.mxu0
        %v2387 = vpop.f32.mrf.mxu0
        %v2388 = vpop.f32.mrf.mxu0
        %2389 = vdwg.mxu0
        %v2390 = vadd.f32 %v1786, %v2385
        %v2391 = vld [vmem:[%s12] sm:$0x1]
        %v2392 = vld [vmem:[%s13] sm:$0x1]
        %2393 = vadd.xlane.f32.xlu0 %v2390
        %v2394 = vpop.xlane.xlu0 %2393
        %v2395 = vmul.f32 %v2394, %v827
        %v2396 = vmul.f32 %v2390, %v2390
        %2397 = vadd.xlane.f32.xlu0 %v2396
        %v2398 = vpop.xlane.xlu0 %2397
        %v2399 = vmul.f32 %v2398, %v827
        %v2400 = vmul.f32 %v2395, %v2395
        %v2401 = vsub.f32 %v2399, %v2400
        %v2402 = vsub.f32 %v2390, %v2395
        %v2403 = vadd.f32 %v2401, 1e-05
        %v2404 = vrsqrt.pop %v2403
        %v2405 = vmul.f32 %v2402, %v2404
        %v2407 = vlaneseq
        %v2408 = vshrl.u32 %v2407, 7
        %v2409 = vsub.s32 0, %v2408
        %v2410 = vrot.slane %v2391, %v2409
        %v2412 = vmul.f32 %v2405, %v2410
        %v2414 = vlaneseq
        %v2415 = vshrl.u32 %v2414, 7
        %v2416 = vsub.s32 0, %v2415
        %v2417 = vrot.slane %v2392, %v2416
        %v2419 = vadd.f32 %v2412, %v2417
        %v2420 = vpack.c.bf16 %v2419, %v2419
        %v2421 = vld [vmem:[#allocation10] sm:$0xff]
        %v2422 = vld [vmem:[#allocation10 + $0x8] sm:$0xff]
        %v2423 = vld [vmem:[#allocation10 + $0x10] sm:$0xff]
        %v2424 = vld [vmem:[#allocation10 + $0x18] sm:$0xff]
        %v2425 = vld [vmem:[#allocation10 + $0x20] sm:$0xff]
        %v2426 = vld [vmem:[#allocation10 + $0x28] sm:$0xff]
        %v2427 = vld [vmem:[#allocation10 + $0x30] sm:$0xff]
        %v2428 = vld [vmem:[#allocation10 + $0x38] sm:$0xff]
        %v2429 = vld [vmem:[#allocation10 + $0x40] sm:$0xff]
        %v2430 = vld [vmem:[#allocation10 + $0x48] sm:$0xff]
        %v2431 = vld [vmem:[#allocation10 + $0x50] sm:$0xff]
        %v2432 = vld [vmem:[#allocation10 + $0x58] sm:$0xff]
        %v2433 = vld [vmem:[#allocation10 + $0x60] sm:$0xff]
        %v2434 = vld [vmem:[#allocation10 + $0x68] sm:$0xff]
        %v2435 = vld [vmem:[#allocation10 + $0x70] sm:$0xff]
        %v2436 = vld [vmem:[#allocation10 + $0x78] sm:$0xff]
        %v2437 = vld [vmem:[%s15] sm:$0x3]
        %v2439 = vlaneseq
        %v2440 = vshrl.u32 %v2439, 7
        %v2441 = vsub.s32 0, %v2440
        %v2442 = vrot.slane %v2437, %v2441
        %v2443 = vlaneseq
        %v2444 = vshrl.u32 %v2443, 7
        %v2445 = vsub.s32 1, %v2444
        %v2446 = vrot.slane %v2437, %v2445
        %v2465 = vunpack.c.l.b16 %v2421
        %v2466 = vunpack.c.h.b16 %v2421
        %v2467 = vunpack.c.l.b16 %v2422
        %v2468 = vunpack.c.h.b16 %v2422
        %v2469 = vunpack.c.l.b16 %v2423
        %v2470 = vunpack.c.h.b16 %v2423
        %v2471 = vunpack.c.l.b16 %v2424
        %v2472 = vunpack.c.h.b16 %v2424
        %v2473 = vunpack.c.l.b16 %v2425
        %v2474 = vunpack.c.h.b16 %v2425
        %v2475 = vunpack.c.l.b16 %v2426
        %v2476 = vunpack.c.h.b16 %v2426
        %v2477 = vunpack.c.l.b16 %v2427
        %v2478 = vunpack.c.h.b16 %v2427
        %v2479 = vunpack.c.l.b16 %v2428
        %v2480 = vunpack.c.h.b16 %v2428
        %v2481 = vunpack.c.l.b16 %v2429
        %v2482 = vunpack.c.h.b16 %v2429
        %v2483 = vunpack.c.l.b16 %v2430
        %v2484 = vunpack.c.h.b16 %v2430
        %v2485 = vunpack.c.l.b16 %v2431
        %v2486 = vunpack.c.h.b16 %v2431
        %v2487 = vunpack.c.l.b16 %v2432
        %v2488 = vunpack.c.h.b16 %v2432
        %v2489 = vunpack.c.l.b16 %v2433
        %v2490 = vunpack.c.h.b16 %v2433
        %v2491 = vunpack.c.l.b16 %v2434
        %v2492 = vunpack.c.h.b16 %v2434
        %v2493 = vunpack.c.l.b16 %v2435
        %v2494 = vunpack.c.h.b16 %v2435
        %v2495 = vunpack.c.l.b16 %v2436
        %v2496 = vunpack.c.h.b16 %v2436
        %v2497 = vpack.c.b16 %v2467, %v2465
        %v2498 = vpack.c.b16 %v2468, %v2466
        %v2499 = vpack.c.b16 %v2471, %v2469
        %v2500 = vpack.c.b16 %v2472, %v2470
        %v2501 = vpack.c.b16 %v2475, %v2473
        %v2502 = vpack.c.b16 %v2476, %v2474
        %v2503 = vpack.c.b16 %v2479, %v2477
        %v2504 = vpack.c.b16 %v2480, %v2478
        %v2505 = vpack.c.b16 %v2483, %v2481
        %v2506 = vpack.c.b16 %v2484, %v2482
        %v2507 = vpack.c.b16 %v2487, %v2485
        %v2508 = vpack.c.b16 %v2488, %v2486
        %v2509 = vpack.c.b16 %v2491, %v2489
        %v2510 = vpack.c.b16 %v2492, %v2490
        %v2511 = vpack.c.b16 %v2495, %v2493
        %v2512 = vpack.c.b16 %v2496, %v2494
        %2529 = vmatprep.subr.bf16.mxu0 %v2512
        %2530 = vmatpush1.bf16.msra.mxu0 %v2511
        %2531 = vmatprep.subr.bf16.mxu0 %v2510
        %2532 = vmatpush1.bf16.msra.mxu0 %v2509
        %2533 = vmatprep.subr.bf16.mxu0 %v2508
        %2534 = vmatpush1.bf16.msra.mxu0 %v2507
        %2535 = vmatprep.subr.bf16.mxu0 %v2506
        %2536 = vmatpush1.bf16.msra.mxu0 %v2505
        %2537 = vmatprep.subr.bf16.mxu0 %v2504
        %2538 = vmatpush1.bf16.msra.mxu0 %v2503
        %2539 = vmatprep.subr.bf16.mxu0 %v2502
        %2540 = vmatpush1.bf16.msra.mxu0 %v2501
        %2541 = vmatprep.subr.bf16.mxu0 %v2500
        %2542 = vmatpush1.bf16.msra.mxu0 %v2499
        %2543 = vmatprep.subr.bf16.mxu0 %v2498
        %2544 = vmatpush1.bf16.msra.mxu0 %v2497
        %2545 = vmatprep.subr.bf16.mxu0 0
        %2546 = vmatpush2.bf16.msra.mxu0 0
        %2547 = vmatprep.subr.bf16.mxu0 0
        %2548 = vmatpush2.bf16.msra.mxu0 0
        %2549 = vmatprep.subr.bf16.mxu0 0
        %2550 = vmatpush2.bf16.msra.mxu0 0
        %2551 = vmatprep.subr.bf16.mxu0 0
        %2552 = vmatpush2.bf16.msra.mxu0 0
        %2553 = vmatprep.subr.bf16.mxu0 0
        %2554 = vmatpush2.bf16.msra.mxu0 0
        %2555 = vmatprep.subr.bf16.mxu0 0
        %2556 = vmatpush2.bf16.msra.mxu0 0
        %2557 = vmatprep.subr.bf16.mxu0 0
        %2558 = vmatpush2.bf16.msra.mxu0 0
        %2559 = vmatprep.subr.bf16.mxu0 0
        %2560 = vmatpush2.bf16.msra.mxu0 0
        %2561 = vmatprep.mubr.bf16.mxu0 0
        %2562 = vmatmul.mubr.bf16.gmra.mxu0 %v2420
        %v2563 = vpop.f32.mrf.mxu0
        %v2564 = vadd.f32 %v2442, %v2563
        %v2565 = vpop.f32.mrf.mxu0
        %v2566 = vadd.f32 %v2446, %v2565
        %v2567 = vpop.f32.mrf.mxu0
        %v2568 = vpop.f32.mrf.mxu0
        %2569 = vdwg.mxu0
        %2570 = vst [vmem:[%s585] sm:$0xff] %v2564
        %2571 = vst [vmem:[%s585 + $0x8] sm:$0xff] %v2566
        %s2572 = sand.u32 %s382, 1
        %s2573 = scalar_lea.sflag [#allocation4], %s2572
        %s2574 = sand.u32 %s382, 1
        %s2575 = smul.addr %s2574, 16
        %s2576 = scalar_lea.vmem [#allocation11], %s2575
        // Predicated region
        $region105: #{forward.1} parent=83 // pred_check
          %p2577 = pneg %p392
        $region106: #{forward.1} parent=83 // pred_check_branch
          %2579 = sbr.rel (%p2577) target = $region108
        $region107: #{forward.1} parent=83 // pred_region
          %s2581 = ssub.s32 256, 256
          %2582 = vsyncadd %s2573, %s2581
          %s2583 = smul.addr %s33, 2
          %s2584 = smul.addr %s2583, 128
          %s2585 = scalar_lea.hbm %s16, %s2584
          %s2587 = sshll.u32 %s2576, 4
          %s2588 = int_to_ptr.vmem [resolvable:$true] %s2587
          %2590 = dma.vmem_to_hbm [thread:$0]  %s2588, 256, %s2585, %s2573
        $region108: #{forward.1} parent=83 // pred_fallthru
          _
      $region84: #{forward.1} parent=5 // pred_fallthru
        _
      %p2591 = scmp.le.s32.totalorder 2, %s28
      // Predicated region
      $region109: #{forward.1} parent=5 // pred_check
        %p2592 = pneg %p2591
      $region110: #{forward.1} parent=5 // pred_check_branch
        %2594 = sbr.rel (%p2592) target = $region112
      $region111: #{forward.1} parent=5 // pred_region
        %s2595 = ssub.s32 %s28, 2
        // Predicated region
        $region113: #{forward.1} parent=111 // pred_check
          %p2596 = pneg %p398
        $region114: #{forward.1} parent=111 // pred_check_branch
          %2598 = sbr.rel (%p2596) target = $region116
        $region115: #{forward.1} parent=111 // pred_region
          %s2599 = sand.u32 %s383, 1
          %s2600 = scalar_lea.sflag [#allocation4], %s2599
          %s2601 = sand.u32 %s383, 1
          %s2602 = smul.addr %s2601, 16
          %s2603 = scalar_lea.vmem [#allocation11], %s2602
          %2604 = dma.done %s2600, 256
        $region116: #{forward.1} parent=111 // pred_fallthru
          _
      $region112: #{forward.1} parent=5 // pred_fallthru
        _
    $region6: #{forward.1} parent=1 // loop_footer
      %s32 = sadd.s32 1, %s28
    $region7: #{forward.1} parent=1 // loop_footer_branch
      %27 = sbr.rel target = $region3
    $region8: #{forward.1} parent=1 // loop_exit
      _
    %2605 = vsyncpa [#allocation3], 1
    %s2606 = scalar_lea.sflag [#allocation3], 1
    %2607 = vsyncpa %s2606, 1
    %2608 = vsyncpa [#allocation6], 1
    %2609 = vsyncpa [#allocation9], 1
    %2610 = vsyncpa [#allocation4], 1
    %s2611 = scalar_lea.sflag [#allocation4], 1
    %2612 = vsyncpa %s2611, 1

</llo_original>
